<compile_context>
chip_gen: v7x
topology: tpu7x:2x2x1
jax: 0.10.0
libtpu: 0.0.40
codegen_flags: <defaults>
</compile_context>

<pallas_src>
import numpy as np
import jax
import jax.numpy as jnp
from jax.experimental import pallas as pl
from jax.experimental.pallas import tpu as pltpu

_BF16 = jnp.bfloat16
_F32 = jnp.float32


# --------------------------------------------------------------------------
# Kernel 1: embedding slab -> (conv + relu + pool) x3 -> lane-dense flatten
#           + per-tile BatchNorm partial statistics.
# --------------------------------------------------------------------------
def _conv_pool_kernel(x_ref, w1_ref, b1_ref, w2_ref, b2_ref, w3_ref, b3_ref,
                      z_ref, stats_ref):
    tn = x_ref.shape[1]

    def conv_relu(x, w_ref, b_ref, k, pad):
        # x: (L_in, tn, C) f32 ; w_ref: (k*C, 32) bf16 ; b_ref: (1, 32) f32
        l_in, _, c = x.shape
        l_out = l_in + 2 * pad - k + 1
        zpad = jnp.zeros((pad, tn, c), _F32)
        xp = jnp.concatenate([zpad, x, zpad], axis=0)          # (l_in+2p, tn, c)
        # Fuse the k taps into one matmul: lane-concat the shifted tap views.
        slab = jnp.concatenate([xp[t:t + l_out] for t in range(k)], axis=-1)
        a = slab.reshape(l_out * tn, k * c).astype(_BF16)
        y = jnp.dot(a, w_ref[...], preferred_element_type=_F32)
        y = jnp.maximum(y + b_ref[...], 0.0)
        return y.reshape(l_out, tn, 32)

    def maxpool2(x):
        # MaxPool1d(kernel_size=2, stride=2); drops a trailing odd position.
        l_out = x.shape[0] // 2
        y = x[:2 * l_out].reshape(l_out, 2, tn, x.shape[2])
        return jnp.maximum(y[:, 0], y[:, 1])

    x = x_ref[...].astype(_F32)                                # (W, tn, 32)
    # TODO(synk): F.dropout(p=0.25) after each pooling stage is stochastic
    # (train-mode); modelled as identity (inference semantics).
    y = conv_relu(x, w1_ref, b1_ref, k=2, pad=1)               # (W+1, tn, 32)
    y = maxpool2(y)
    y = conv_relu(y, w2_ref, b2_ref, k=3, pad=1)
    y = maxpool2(y)
    y = conv_relu(y, w3_ref, b3_ref, k=4, pad=2)
    y = maxpool2(y)                                            # (4, tn, 32)

    # Channel-major flatten onto a lane-dense 128-wide slab: lane = l*32 + c.
    l3 = y.shape[0]
    flat = jnp.concatenate([y[l] for l in range(l3)], axis=-1)  # (tn, 128) f32
    z_ref[...] = flat.astype(_BF16)

    # Per-tile partial BatchNorm statistics (sum / sum-of-squares over rows).
    s = jnp.sum(flat, axis=0, keepdims=True)                    # (1, 128)
    ss = jnp.sum(flat * flat, axis=0, keepdims=True)            # (1, 128)
    stats_ref[0, 0:1, :] = s
    stats_ref[0, 1:2, :] = ss


# --------------------------------------------------------------------------
# Kernel 2: (BN-folded) Linear_1 + ReLU + Linear_2, lane-dense in/out.
# --------------------------------------------------------------------------
def _linear_kernel(z_ref, w1_ref, b1_ref, w2_ref, b2_ref, out_ref):
    h = jnp.dot(z_ref[...], w1_ref[...], preferred_element_type=_F32)
    h = jnp.maximum(h + b1_ref[...], 0.0)
    # TODO(synk): F.dropout(p=0.25) after Linear_1's ReLU modelled as identity.
    out = jnp.dot(h.astype(_BF16), w2_ref[...], preferred_element_type=_F32)
    out_ref[...] = out + b2_ref[...]


# --------------------------------------------------------------------------
# Wrapper
# --------------------------------------------------------------------------
def _pick_tile(n, max_tile=256):
    t = min(max_tile, n)
    while n % t:
        t -= 8
    return t


def _stack_conv_weight(w, c_in_pad=32):
    # PyTorch Conv1d weight (C_out, C_in, K) -> (K*c_in_pad, C_out) bf16,
    # row index = t*c_in_pad + ci  (matches the in-kernel tap lane-concat order).
    c_out, c_in, k = w.shape
    wt = jnp.transpose(w, (2, 1, 0))                            # (K, C_in, C_out)
    wt = jnp.pad(wt, ((0, 0), (0, c_in_pad - c_in), (0, 0)))
    return wt.reshape(k * c_in_pad, c_out).astype(_BF16)


def char_cnn_forward(x_idx, params):
    B, S, w_len = x_idx.shape
    n = B * S
    assert n % 8 == 0, "batch*seq lives on sublanes; keep it a multiple of 8"

    # Static length bookkeeping: must end at 4 positions (32*4 = 128 -> Linear_1).
    c1 = w_len + 2 * 1 - 2 + 1; l1 = c1 // 2
    c2 = l1 + 2 * 1 - 3 + 1;    l2 = c2 // 2
    c3 = l2 + 2 * 2 - 4 + 1;    l3 = c3 // 2
    assert 32 * l3 == 128, "max_word_len must make the flatten equal 128"

    tile_n = _pick_tile(n)
    grid = (n // tile_n,)
    cparams = pltpu.CompilerParams(
        dimension_semantics=("parallel",),
        vmem_limit_bytes=48 * 1024 * 1024,
    )

    # Embedding gather emitted directly in the kernel's (W, n, 32) bf16 layout:
    # no f32 transpose copy, half the HBM bytes of the previous version.
    # nn.init.uniform_ overwrites the padding_idx row too, so no zeroing here.
    # TODO(synk): gather left to XLA; an in-kernel Mosaic vector gather of the
    # (1000, 32) table is not guaranteed to lower, so it stays in the wrapper.
    emb = jnp.pad(params["emb"].astype(_BF16), ((0, 0), (0, 2)))   # (1000, 32)
    idx_t = x_idx.reshape(n, w_len).T                              # (W, n) int32
    x_emb = jnp.take(emb, idx_t, axis=0)                           # (W, n, 32) bf16

    w1s = _stack_conv_weight(params["conv1_w"])                    # (64, 32)
    w2s = _stack_conv_weight(params["conv2_w"])                    # (96, 32)
    w3s = _stack_conv_weight(params["conv3_w"])                    # (128, 32)
    b1 = params["conv1_b"].reshape(1, 32).astype(_F32)
    b2 = params["conv2_b"].reshape(1, 32).astype(_F32)
    b3 = params["conv3_b"].reshape(1, 32).astype(_F32)

    def const_spec(shape):
        return pl.BlockSpec(shape, lambda i: (0,) * len(shape))

    z, stats = pl.pallas_call(
        _conv_pool_kernel,
        grid=grid,
        in_specs=[
            pl.BlockSpec((w_len, tile_n, 32), lambda i: (0, i, 0)),
            const_spec((2 * 32, 32)), const_spec((1, 32)),
            const_spec((3 * 32, 32)), const_spec((1, 32)),
            const_spec((4 * 32, 32)), const_spec((1, 32)),
        ],
        out_specs=(
            pl.BlockSpec((tile_n, 128), lambda i: (i, 0)),
            pl.BlockSpec((1, 2, 128), lambda i: (i, 0, 0)),
        ),
        out_shape=(
            jax.ShapeDtypeStruct((n, 128), _BF16),
            jax.ShapeDtypeStruct((grid[0], 2, 128), _F32),
        ),
        compiler_params=cparams,
    )(x_emb, w1s, b1, w2s, b2, w3s, b3)

    # BatchNorm1d: training-mode statistics over the FULL batch (N*L rows),
    # combined from per-tile partial sums and folded into Linear_1.
    cnt = jnp.float32(n * l3)
    tot = jnp.sum(stats[:, 0, :], axis=0).reshape(l3, 32)
    tot2 = jnp.sum(stats[:, 1, :], axis=0).reshape(l3, 32)
    mean = jnp.sum(tot, axis=0) / cnt                              # (32,)
    var = jnp.sum(tot2, axis=0) / cnt - mean * mean                # biased (train)
    scale = params["bn_gamma"] * jax.lax.rsqrt(var + 1e-5)
    shift = params["bn_beta"] - mean * scale

    # Linear_1 weight (100, 128); PyTorch NCL flatten feature = c*4 + l,
    # kernel lane index = l*32 + c  ->  reshuffle + fold the BN affine.
    w1_lc = jnp.transpose(params["lin1_w"].reshape(100, 32, l3), (2, 1, 0))  # (l,c,o)
    w1f = (w1_lc * scale[None, :, None]).reshape(l3 * 32, 100)
    b1f = params["lin1_b"] + jnp.einsum("lco,c->o", w1_lc, shift)
    # Pad both linears to 128 lanes so every kernel store is lane-dense.
    w1p = jnp.zeros((128, 128), _BF16).at[:, :100].set(w1f.astype(_BF16))
    b1p = jnp.zeros((1, 128), _F32).at[0, :100].set(b1f)
    w2p = jnp.zeros((128, 128), _BF16).at[:100, :50].set(
        params["lin2_w"].T.astype(_BF16))
    b2p = jnp.zeros((1, 128), _F32).at[0, :50].set(params["lin2_b"])

    out = pl.pallas_call(
        _linear_kernel,
        grid=grid,
        in_specs=[
            pl.BlockSpec((tile_n, 128), lambda i: (i, 0)),
            const_spec((128, 128)), const_spec((1, 128)),
            const_spec((128, 128)), const_spec((1, 128)),
        ],
        out_specs=pl.BlockSpec((tile_n, 128), lambda i: (i, 0)),
        out_shape=jax.ShapeDtypeStruct((n, 128), _F32),
        compiler_params=cparams,
    )(z, w1p, b1p, w2p, b2p)

    return out[:, :50].reshape(B, S, 50)


def init_params(key):
    """Deterministic synthetic parameters with the shapes from CharCNN.__init__."""
    ks = jax.random.split(key, 11)

    def u(k, shape, fan_in):
        bound = 1.0 / float(np.sqrt(fan_in))
        return jax.random.uniform(k, shape, jnp.float32, -bound, bound)

    return {
        # nn.init.uniform_(-0.25, 0.25) overwrites the padding_idx row too,
        # matching the PyTorch module's actual post-init state.
        "emb": jax.random.uniform(ks[0], (1000, 30), jnp.float32, -0.25, 0.25),
        "conv1_w": u(ks[1], (32, 30, 2), 30 * 2),
        "conv1_b": u(ks[2], (32,), 30 * 2),
        "conv2_w": u(ks[3], (32, 32, 3), 32 * 3),
        "conv2_b": u(ks[4], (32,), 32 * 3),
        "conv3_w": u(ks[5], (32, 32, 4), 32 * 4),
        "conv3_b": u(ks[6], (32,), 32 * 4),
        "bn_gamma": jnp.ones((32,), jnp.float32),
        "bn_beta": jnp.zeros((32,), jnp.float32),
        "lin1_w": u(ks[7], (100, 128), 128),
        "lin1_b": u(ks[8], (100,), 128),
        "lin2_w": u(ks[9], (50, 100), 100),
        "lin2_b": u(ks[10], (50,), 100),
    }


if __name__ == "__main__":
    key = jax.random.PRNGKey(0)
    pkey, xkey = jax.random.split(key)
    params = init_params(pkey)

    # max_word_len = 32 -> lengths 33->16->16->8->9->4, flatten 32*4 = 128.
    B, S, W = 2, 4, 32
    x_idx = jax.random.randint(xkey, (B, S, W), 0, 1000, dtype=jnp.int32)

    fwd = jax.jit(char_cnn_forward)
    out = jax.block_until_ready(fwd(x_idx, params))
    assert out.shape == (B, S, 50) and out.dtype == jnp.float32
    assert bool(jnp.all(jnp.isfinite(out)))
    print("KERNEL_OK")
</pallas_src>

<mosaic_0001>
module attributes {stable_mosaic.version = 11 : i64} {
  func.func @_conv_pool_kernel(%arg0: i32, %arg1: memref<32x8x32xbf16, #tpu.memory_space<vmem>>, %arg2: memref<64x32xbf16, #tpu.memory_space<vmem>>, %arg3: memref<1x32xf32, #tpu.memory_space<vmem>>, %arg4: memref<96x32xbf16, #tpu.memory_space<vmem>>, %arg5: memref<1x32xf32, #tpu.memory_space<vmem>>, %arg6: memref<128x32xbf16, #tpu.memory_space<vmem>>, %arg7: memref<1x32xf32, #tpu.memory_space<vmem>>, %arg8: memref<8x128xbf16, #tpu.memory_space<vmem>>, %arg9: memref<1x2x128xf32, #tpu.memory_space<vmem>>) attributes {dimension_semantics = [#tpu.dimension_semantics<parallel>], iteration_bounds = array<i64: 1>, scalar_prefetch = 0 : i64, scratch_operands = 0 : i64, tpu.core_type = #tpu.core_type<tc>, window_params = [{transform_indices = @transform_0, window_bounds = array<i64: 32, 8, 32>}, {pipeline_mode = #tpu.pipeline_mode<synchronous>, transform_indices = @transform_1, window_bounds = array<i64: 64, 32>}, {pipeline_mode = #tpu.pipeline_mode<synchronous>, transform_indices = @transform_2, window_bounds = array<i64: 1, 32>}, {pipeline_mode = #tpu.pipeline_mode<synchronous>, transform_indices = @transform_3, window_bounds = array<i64: 96, 32>}, {pipeline_mode = #tpu.pipeline_mode<synchronous>, transform_indices = @transform_4, window_bounds = array<i64: 1, 32>}, {pipeline_mode = #tpu.pipeline_mode<synchronous>, transform_indices = @transform_5, window_bounds = array<i64: 128, 32>}, {pipeline_mode = #tpu.pipeline_mode<synchronous>, transform_indices = @transform_6, window_bounds = array<i64: 1, 32>}, {transform_indices = @transform_7, window_bounds = array<i64: 8, 128>}, {transform_indices = @transform_8, window_bounds = array<i64: 1, 2, 128>}]} {
    %c0 = arith.constant 0 : index
    %c0_0 = arith.constant 0 : index
    %c0_1 = arith.constant 0 : index
    %0 = vector.load %arg1[%c0, %c0_0, %c0_1] : memref<32x8x32xbf16, #tpu.memory_space<vmem>>, vector<32x8x32xbf16>
    %1 = arith.extf %0 : vector<32x8x32xbf16> to vector<32x8x32xf32>
    %cst = arith.constant 0.000000e+00 : f32
    %2 = vector.broadcast %cst : f32 to vector<1x8x32xf32>
    %3 = tpu.concatenate %2, %1, %2 in 0 : vector<1x8x32xf32>, vector<32x8x32xf32>, vector<1x8x32xf32> -> vector<34x8x32xf32>
    %4 = vector.extract_strided_slice %3 {offsets = [0, 0, 0], sizes = [33, 8, 32], strides = [1, 1, 1]} : vector<34x8x32xf32> to vector<33x8x32xf32>
    %5 = vector.extract_strided_slice %3 {offsets = [1, 0, 0], sizes = [33, 8, 32], strides = [1, 1, 1]} : vector<34x8x32xf32> to vector<33x8x32xf32>
    %6 = tpu.concatenate %4, %5 in 2 : vector<33x8x32xf32>, vector<33x8x32xf32> -> vector<33x8x64xf32>
    %7 = vector.shape_cast %6 : vector<33x8x64xf32> to vector<264x64xf32>
    %8 = arith.truncf %7 : vector<264x64xf32> to vector<264x64xbf16>
    %c0_2 = arith.constant 0 : index
    %c0_3 = arith.constant 0 : index
    %9 = vector.load %arg2[%c0_2, %c0_3] : memref<64x32xbf16, #tpu.memory_space<vmem>>, vector<64x32xbf16>
    %cst_4 = arith.constant dense<0.000000e+00> : vector<264x32xf32>
    %10 = tpu.matmul %8, %9, %cst_4 {dimension_numbers = #tpu.dot_dimension_numbers<[1], [0], [0], [1], [0, 0, 1, 1], [], []>} : vector<264x64xbf16>, vector<64x32xbf16>, vector<264x32xf32> -> vector<264x32xf32>
    %c0_5 = arith.constant 0 : index
    %c0_6 = arith.constant 0 : index
    %11 = vector.load %arg3[%c0_5, %c0_6] : memref<1x32xf32, #tpu.memory_space<vmem>>, vector<1x32xf32>
    %12 = vector.broadcast %11 : vector<1x32xf32> to vector<264x32xf32>
    %13 = arith.addf %10, %12 : vector<264x32xf32>
    %cst_7 = arith.constant 0.000000e+00 : f32
    %14 = vector.broadcast %cst_7 : f32 to vector<264x32xf32>
    %15 = arith.maximumf %13, %14 : vector<264x32xf32>
    %16 = vector.shape_cast %15 : vector<264x32xf32> to vector<33x8x32xf32>
    %17 = vector.extract_strided_slice %16 {offsets = [0, 0, 0], sizes = [32, 8, 32], strides = [1, 1, 1]} : vector<33x8x32xf32> to vector<32x8x32xf32>
    %18 = vector.shape_cast %17 : vector<32x8x32xf32> to vector<16x2x8x32xf32>
    %19 = vector.extract_strided_slice %18 {offsets = [0, 0, 0, 0], sizes = [16, 1, 8, 32], strides = [1, 1, 1, 1]} : vector<16x2x8x32xf32> to vector<16x1x8x32xf32>
    %20 = vector.shape_cast %19 : vector<16x1x8x32xf32> to vector<16x8x32xf32>
    %21 = vector.extract_strided_slice %18 {offsets = [0, 1, 0, 0], sizes = [16, 1, 8, 32], strides = [1, 1, 1, 1]} : vector<16x2x8x32xf32> to vector<16x1x8x32xf32>
    %22 = vector.shape_cast %21 : vector<16x1x8x32xf32> to vector<16x8x32xf32>
    %23 = arith.maximumf %20, %22 : vector<16x8x32xf32>
    %cst_8 = arith.constant 0.000000e+00 : f32
    %24 = vector.broadcast %cst_8 : f32 to vector<1x8x32xf32>
    %25 = tpu.concatenate %24, %23, %24 in 0 : vector<1x8x32xf32>, vector<16x8x32xf32>, vector<1x8x32xf32> -> vector<18x8x32xf32>
    %26 = vector.extract_strided_slice %25 {offsets = [0, 0, 0], sizes = [16, 8, 32], strides = [1, 1, 1]} : vector<18x8x32xf32> to vector<16x8x32xf32>
    %27 = vector.extract_strided_slice %25 {offsets = [1, 0, 0], sizes = [16, 8, 32], strides = [1, 1, 1]} : vector<18x8x32xf32> to vector<16x8x32xf32>
    %28 = vector.extract_strided_slice %25 {offsets = [2, 0, 0], sizes = [16, 8, 32], strides = [1, 1, 1]} : vector<18x8x32xf32> to vector<16x8x32xf32>
    %29 = tpu.concatenate %26, %27, %28 in 2 : vector<16x8x32xf32>, vector<16x8x32xf32>, vector<16x8x32xf32> -> vector<16x8x96xf32>
    %30 = vector.shape_cast %29 : vector<16x8x96xf32> to vector<128x96xf32>
    %31 = arith.truncf %30 : vector<128x96xf32> to vector<128x96xbf16>
    %c0_9 = arith.constant 0 : index
    %c0_10 = arith.constant 0 : index
    %32 = vector.load %arg4[%c0_9, %c0_10] : memref<96x32xbf16, #tpu.memory_space<vmem>>, vector<96x32xbf16>
    %cst_11 = arith.constant dense<0.000000e+00> : vector<128x32xf32>
    %33 = tpu.matmul %31, %32, %cst_11 {dimension_numbers = #tpu.dot_dimension_numbers<[1], [0], [0], [1], [0, 0, 1, 1], [], []>} : vector<128x96xbf16>, vector<96x32xbf16>, vector<128x32xf32> -> vector<128x32xf32>
    %c0_12 = arith.constant 0 : index
    %c0_13 = arith.constant 0 : index
    %34 = vector.load %arg5[%c0_12, %c0_13] : memref<1x32xf32, #tpu.memory_space<vmem>>, vector<1x32xf32>
    %35 = vector.broadcast %34 : vector<1x32xf32> to vector<128x32xf32>
    %36 = arith.addf %33, %35 : vector<128x32xf32>
    %cst_14 = arith.constant 0.000000e+00 : f32
    %37 = vector.broadcast %cst_14 : f32 to vector<128x32xf32>
    %38 = arith.maximumf %36, %37 : vector<128x32xf32>
    %39 = vector.shape_cast %38 : vector<128x32xf32> to vector<16x8x32xf32>
    %40 = vector.shape_cast %39 : vector<16x8x32xf32> to vector<8x2x8x32xf32>
    %41 = vector.extract_strided_slice %40 {offsets = [0, 0, 0, 0], sizes = [8, 1, 8, 32], strides = [1, 1, 1, 1]} : vector<8x2x8x32xf32> to vector<8x1x8x32xf32>
    %42 = vector.shape_cast %41 : vector<8x1x8x32xf32> to vector<8x8x32xf32>
    %43 = vector.extract_strided_slice %40 {offsets = [0, 1, 0, 0], sizes = [8, 1, 8, 32], strides = [1, 1, 1, 1]} : vector<8x2x8x32xf32> to vector<8x1x8x32xf32>
    %44 = vector.shape_cast %43 : vector<8x1x8x32xf32> to vector<8x8x32xf32>
    %45 = arith.maximumf %42, %44 : vector<8x8x32xf32>
    %cst_15 = arith.constant 0.000000e+00 : f32
    %46 = vector.broadcast %cst_15 : f32 to vector<2x8x32xf32>
    %47 = tpu.concatenate %46, %45, %46 in 0 : vector<2x8x32xf32>, vector<8x8x32xf32>, vector<2x8x32xf32> -> vector<12x8x32xf32>
    %48 = vector.extract_strided_slice %47 {offsets = [0, 0, 0], sizes = [9, 8, 32], strides = [1, 1, 1]} : vector<12x8x32xf32> to vector<9x8x32xf32>
    %49 = vector.extract_strided_slice %47 {offsets = [1, 0, 0], sizes = [9, 8, 32], strides = [1, 1, 1]} : vector<12x8x32xf32> to vector<9x8x32xf32>
    %50 = vector.extract_strided_slice %47 {offsets = [2, 0, 0], sizes = [9, 8, 32], strides = [1, 1, 1]} : vector<12x8x32xf32> to vector<9x8x32xf32>
    %51 = vector.extract_strided_slice %47 {offsets = [3, 0, 0], sizes = [9, 8, 32], strides = [1, 1, 1]} : vector<12x8x32xf32> to vector<9x8x32xf32>
    %52 = tpu.concatenate %48, %49, %50, %51 in 2 : vector<9x8x32xf32>, vector<9x8x32xf32>, vector<9x8x32xf32>, vector<9x8x32xf32> -> vector<9x8x128xf32>
    %53 = vector.shape_cast %52 : vector<9x8x128xf32> to vector<72x128xf32>
    %54 = arith.truncf %53 : vector<72x128xf32> to vector<72x128xbf16>
    %c0_16 = arith.constant 0 : index
    %c0_17 = arith.constant 0 : index
    %55 = vector.load %arg6[%c0_16, %c0_17] : memref<128x32xbf16, #tpu.memory_space<vmem>>, vector<128x32xbf16>
    %cst_18 = arith.constant dense<0.000000e+00> : vector<72x32xf32>
    %56 = tpu.matmul %54, %55, %cst_18 {dimension_numbers = #tpu.dot_dimension_numbers<[1], [0], [0], [1], [0, 0, 1, 1], [], []>} : vector<72x128xbf16>, vector<128x32xbf16>, vector<72x32xf32> -> vector<72x32xf32>
    %c0_19 = arith.constant 0 : index
    %c0_20 = arith.constant 0 : index
    %57 = vector.load %arg7[%c0_19, %c0_20] : memref<1x32xf32, #tpu.memory_space<vmem>>, vector<1x32xf32>
    %58 = vector.broadcast %57 : vector<1x32xf32> to vector<72x32xf32>
    %59 = arith.addf %56, %58 : vector<72x32xf32>
    %cst_21 = arith.constant 0.000000e+00 : f32
    %60 = vector.broadcast %cst_21 : f32 to vector<72x32xf32>
    %61 = arith.maximumf %59, %60 : vector<72x32xf32>
    %62 = vector.shape_cast %61 : vector<72x32xf32> to vector<9x8x32xf32>
    %63 = vector.extract_strided_slice %62 {offsets = [0, 0, 0], sizes = [8, 8, 32], strides = [1, 1, 1]} : vector<9x8x32xf32> to vector<8x8x32xf32>
    %64 = vector.shape_cast %63 : vector<8x8x32xf32> to vector<4x2x8x32xf32>
    %65 = vector.extract_strided_slice %64 {offsets = [0, 0, 0, 0], sizes = [4, 1, 8, 32], strides = [1, 1, 1, 1]} : vector<4x2x8x32xf32> to vector<4x1x8x32xf32>
    %66 = vector.shape_cast %65 : vector<4x1x8x32xf32> to vector<4x8x32xf32>
    %67 = vector.extract_strided_slice %64 {offsets = [0, 1, 0, 0], sizes = [4, 1, 8, 32], strides = [1, 1, 1, 1]} : vector<4x2x8x32xf32> to vector<4x1x8x32xf32>
    %68 = vector.shape_cast %67 : vector<4x1x8x32xf32> to vector<4x8x32xf32>
    %69 = arith.maximumf %66, %68 : vector<4x8x32xf32>
    %70 = vector.extract_strided_slice %69 {offsets = [0, 0, 0], sizes = [1, 8, 32], strides = [1, 1, 1]} : vector<4x8x32xf32> to vector<1x8x32xf32>
    %71 = vector.shape_cast %70 : vector<1x8x32xf32> to vector<8x32xf32>
    %72 = vector.extract_strided_slice %69 {offsets = [1, 0, 0], sizes = [1, 8, 32], strides = [1, 1, 1]} : vector<4x8x32xf32> to vector<1x8x32xf32>
    %73 = vector.shape_cast %72 : vector<1x8x32xf32> to vector<8x32xf32>
    %74 = vector.extract_strided_slice %69 {offsets = [2, 0, 0], sizes = [1, 8, 32], strides = [1, 1, 1]} : vector<4x8x32xf32> to vector<1x8x32xf32>
    %75 = vector.shape_cast %74 : vector<1x8x32xf32> to vector<8x32xf32>
    %76 = vector.extract_strided_slice %69 {offsets = [3, 0, 0], sizes = [1, 8, 32], strides = [1, 1, 1]} : vector<4x8x32xf32> to vector<1x8x32xf32>
    %77 = vector.shape_cast %76 : vector<1x8x32xf32> to vector<8x32xf32>
    %78 = tpu.concatenate %71, %73, %75, %77 in 1 : vector<8x32xf32>, vector<8x32xf32>, vector<8x32xf32>, vector<8x32xf32> -> vector<8x128xf32>
    %79 = arith.truncf %78 : vector<8x128xf32> to vector<8x128xbf16>
    %c0_22 = arith.constant 0 : index
    %c0_23 = arith.constant 0 : index
    %80 = vector.load %arg8[%c0_22, %c0_23] : memref<8x128xbf16, #tpu.memory_space<vmem>>, vector<8x128xbf16>
    tpu.vector_store %arg8[%c0_22, %c0_23], %79 {strides = array<i32>} : memref<8x128xbf16, #tpu.memory_space<vmem>>, vector<8x128xbf16>,
    %cst_24 = arith.constant dense<0.000000e+00> : vector<128xf32>
    %81 = vector.multi_reduction <add>, %78, %cst_24 [0] : vector<8x128xf32> to vector<128xf32>
    %82 = vector.shape_cast %81 : vector<128xf32> to vector<1x128xf32>
    %83 = arith.mulf %78, %78 : vector<8x128xf32>
    %cst_25 = arith.constant dense<0.000000e+00> : vector<128xf32>
    %84 = vector.multi_reduction <add>, %83, %cst_25 [0] : vector<8x128xf32> to vector<128xf32>
    %85 = vector.shape_cast %84 : vector<128xf32> to vector<1x128xf32>
    %c0_26 = arith.constant 0 : index
    %c0_27 = arith.constant 0 : index
    %c0_28 = arith.constant 0 : index
    %86 = vector.load %arg9[%c0_26, %c0_27, %c0_28] : memref<1x2x128xf32, #tpu.memory_space<vmem>>, vector<1x1x128xf32>
    %87 = vector.shape_cast %86 : vector<1x1x128xf32> to vector<1x128xf32>
    %88 = vector.shape_cast %82 : vector<1x128xf32> to vector<1x1x128xf32>
    tpu.vector_store %arg9[%c0_26, %c0_27, %c0_28], %88 {strides = array<i32>} : memref<1x2x128xf32, #tpu.memory_space<vmem>>, vector<1x1x128xf32>,
    %c0_29 = arith.constant 0 : index
    %c1 = arith.constant 1 : index
    %c0_30 = arith.constant 0 : index
    %89 = vector.load %arg9[%c0_29, %c1, %c0_30] : memref<1x2x128xf32, #tpu.memory_space<vmem>>, vector<1x1x128xf32>
    %90 = vector.shape_cast %89 : vector<1x1x128xf32> to vector<1x128xf32>
    %91 = vector.shape_cast %85 : vector<1x128xf32> to vector<1x1x128xf32>
    tpu.vector_store %arg9[%c0_29, %c1, %c0_30], %91 {strides = array<i32>} : memref<1x2x128xf32, #tpu.memory_space<vmem>>, vector<1x1x128xf32>,
    return
  }
  func.func @transform_0(%arg0: i32) -> (i32, i32, i32) {
    %c0_i32 = arith.constant 0 : i32
    %c0_i32_0 = arith.constant 0 : i32
    %c0_i32_1 = arith.constant 0 : i32
    return %c0_i32, %arg0, %c0_i32_0 : i32, i32, i32
  }
  func.func @transform_1(%arg0: i32) -> (i32, i32) {
    %c0_i32 = arith.constant 0 : i32
    %c0_i32_0 = arith.constant 0 : i32
    %c0_i32_1 = arith.constant 0 : i32
    return %c0_i32, %c0_i32_0 : i32, i32
  }
  func.func @transform_2(%arg0: i32) -> (i32, i32) {
    %c0_i32 = arith.constant 0 : i32
    %c0_i32_0 = arith.constant 0 : i32
    %c0_i32_1 = arith.constant 0 : i32
    return %c0_i32, %c0_i32_0 : i32, i32
  }
  func.func @transform_3(%arg0: i32) -> (i32, i32) {
    %c0_i32 = arith.constant 0 : i32
    %c0_i32_0 = arith.constant 0 : i32
    %c0_i32_1 = arith.constant 0 : i32
    return %c0_i32, %c0_i32_0 : i32, i32
  }
  func.func @transform_4(%arg0: i32) -> (i32, i32) {
    %c0_i32 = arith.constant 0 : i32
    %c0_i32_0 = arith.constant 0 : i32
    %c0_i32_1 = arith.constant 0 : i32
    return %c0_i32, %c0_i32_0 : i32, i32
  }
  func.func @transform_5(%arg0: i32) -> (i32, i32) {
    %c0_i32 = arith.constant 0 : i32
    %c0_i32_0 = arith.constant 0 : i32
    %c0_i32_1 = arith.constant 0 : i32
    return %c0_i32, %c0_i32_0 : i32, i32
  }
  func.func @transform_6(%arg0: i32) -> (i32, i32) {
    %c0_i32 = arith.constant 0 : i32
    %c0_i32_0 = arith.constant 0 : i32
    %c0_i32_1 = arith.constant 0 : i32
    return %c0_i32, %c0_i32_0 : i32, i32
  }
  func.func @transform_7(%arg0: i32) -> (i32, i32) {
    %c0_i32 = arith.constant 0 : i32
    %c0_i32_0 = arith.constant 0 : i32
    return %arg0, %c0_i32 : i32, i32
  }
  func.func @transform_8(%arg0: i32) -> (i32, i32, i32) {
    %c0_i32 = arith.constant 0 : i32
    %c0_i32_0 = arith.constant 0 : i32
    %c0_i32_1 = arith.constant 0 : i32
    return %arg0, %c0_i32, %c0_i32_0 : i32, i32, i32
  }
}

module attributes {stable_mosaic.version = 11 : i64} {
  func.func @_linear_kernel(%arg0: i32, %arg1: memref<8x128xbf16, #tpu.memory_space<vmem>>, %arg2: memref<128x128xbf16, #tpu.memory_space<vmem>>, %arg3: memref<1x128xf32, #tpu.memory_space<vmem>>, %arg4: memref<128x128xbf16, #tpu.memory_space<vmem>>, %arg5: memref<1x128xf32, #tpu.memory_space<vmem>>, %arg6: memref<8x128xf32, #tpu.memory_space<vmem>>) attributes {dimension_semantics = [#tpu.dimension_semantics<parallel>], iteration_bounds = array<i64: 1>, scalar_prefetch = 0 : i64, scratch_operands = 0 : i64, tpu.core_type = #tpu.core_type<tc>, window_params = [{transform_indices = @transform_0, window_bounds = array<i64: 8, 128>}, {pipeline_mode = #tpu.pipeline_mode<synchronous>, transform_indices = @transform_1, window_bounds = array<i64: 128, 128>}, {pipeline_mode = #tpu.pipeline_mode<synchronous>, transform_indices = @transform_2, window_bounds = array<i64: 1, 128>}, {pipeline_mode = #tpu.pipeline_mode<synchronous>, transform_indices = @transform_3, window_bounds = array<i64: 128, 128>}, {pipeline_mode = #tpu.pipeline_mode<synchronous>, transform_indices = @transform_4, window_bounds = array<i64: 1, 128>}, {transform_indices = @transform_5, window_bounds = array<i64: 8, 128>}]} {
    %c0 = arith.constant 0 : index
    %c0_0 = arith.constant 0 : index
    %0 = vector.load %arg1[%c0, %c0_0] : memref<8x128xbf16, #tpu.memory_space<vmem>>, vector<8x128xbf16>
    %c0_1 = arith.constant 0 : index
    %c0_2 = arith.constant 0 : index
    %1 = vector.load %arg2[%c0_1, %c0_2] : memref<128x128xbf16, #tpu.memory_space<vmem>>, vector<128x128xbf16>
    %cst = arith.constant dense<0.000000e+00> : vector<8x128xf32>
    %2 = tpu.matmul %0, %1, %cst {dimension_numbers = #tpu.dot_dimension_numbers<[1], [0], [0], [1], [0, 0, 1, 1], [], []>} : vector<8x128xbf16>, vector<128x128xbf16>, vector<8x128xf32> -> vector<8x128xf32>
    %c0_3 = arith.constant 0 : index
    %c0_4 = arith.constant 0 : index
    %3 = vector.load %arg3[%c0_3, %c0_4] : memref<1x128xf32, #tpu.memory_space<vmem>>, vector<1x128xf32>
    %4 = vector.broadcast %3 : vector<1x128xf32> to vector<8x128xf32>
    %5 = arith.addf %2, %4 : vector<8x128xf32>
    %cst_5 = arith.constant 0.000000e+00 : f32
    %6 = vector.broadcast %cst_5 : f32 to vector<8x128xf32>
    %7 = arith.maximumf %5, %6 : vector<8x128xf32>
    %8 = arith.truncf %7 : vector<8x128xf32> to vector<8x128xbf16>
    %c0_6 = arith.constant 0 : index
    %c0_7 = arith.constant 0 : index
    %9 = vector.load %arg4[%c0_6, %c0_7] : memref<128x128xbf16, #tpu.memory_space<vmem>>, vector<128x128xbf16>
    %cst_8 = arith.constant dense<0.000000e+00> : vector<8x128xf32>
    %10 = tpu.matmul %8, %9, %cst_8 {dimension_numbers = #tpu.dot_dimension_numbers<[1], [0], [0], [1], [0, 0, 1, 1], [], []>} : vector<8x128xbf16>, vector<128x128xbf16>, vector<8x128xf32> -> vector<8x128xf32>
    %c0_9 = arith.constant 0 : index
    %c0_10 = arith.constant 0 : index
    %11 = vector.load %arg5[%c0_9, %c0_10] : memref<1x128xf32, #tpu.memory_space<vmem>>, vector<1x128xf32>
    %12 = vector.broadcast %11 : vector<1x128xf32> to vector<8x128xf32>
    %13 = arith.addf %10, %12 : vector<8x128xf32>
    %c0_11 = arith.constant 0 : index
    %c0_12 = arith.constant 0 : index
    %14 = vector.load %arg6[%c0_11, %c0_12] : memref<8x128xf32, #tpu.memory_space<vmem>>, vector<8x128xf32>
    tpu.vector_store %arg6[%c0_11, %c0_12], %13 {strides = array<i32>} : memref<8x128xf32, #tpu.memory_space<vmem>>, vector<8x128xf32>,
    return
  }
  func.func @transform_0(%arg0: i32) -> (i32, i32) {
    %c0_i32 = arith.constant 0 : i32
    %c0_i32_0 = arith.constant 0 : i32
    return %arg0, %c0_i32 : i32, i32
  }
  func.func @transform_1(%arg0: i32) -> (i32, i32) {
    %c0_i32 = arith.constant 0 : i32
    %c0_i32_0 = arith.constant 0 : i32
    %c0_i32_1 = arith.constant 0 : i32
    return %c0_i32, %c0_i32_0 : i32, i32
  }
  func.func @transform_2(%arg0: i32) -> (i32, i32) {
    %c0_i32 = arith.constant 0 : i32
    %c0_i32_0 = arith.constant 0 : i32
    %c0_i32_1 = arith.constant 0 : i32
    return %c0_i32, %c0_i32_0 : i32, i32
  }
  func.func @transform_3(%arg0: i32) -> (i32, i32) {
    %c0_i32 = arith.constant 0 : i32
    %c0_i32_0 = arith.constant 0 : i32
    %c0_i32_1 = arith.constant 0 : i32
    return %c0_i32, %c0_i32_0 : i32, i32
  }
  func.func @transform_4(%arg0: i32) -> (i32, i32) {
    %c0_i32 = arith.constant 0 : i32
    %c0_i32_0 = arith.constant 0 : i32
    %c0_i32_1 = arith.constant 0 : i32
    return %c0_i32, %c0_i32_0 : i32, i32
  }
  func.func @transform_5(%arg0: i32) -> (i32, i32) {
    %c0_i32 = arith.constant 0 : i32
    %c0_i32_0 = arith.constant 0 : i32
    return %arg0, %c0_i32 : i32, i32
  }
}

</mosaic_0001>

<llo_original>
// kernel: char_cnn_forward.3
$region0: #{char_cnn_forward.3}
  #allocation0 [shape = 'u32[]', space=smem, size = 0x4, offset = 0x4, fixed_abs, tag = 'smem constant byte address 0x4 - core index']
  #allocation1 [shape = 'u32[144,128]{1,0:T(1,128)}', space=vmem, size = 0x12000, scoped, tag = 'internal scratch']
  %s0 = inlined_call_operand.vmem [shape: bf16[8,128], index: 0, kind: input, shape index: {}]
  %s1 = inlined_call_operand.vmem [shape: bf16[128,128], index: 1, kind: input, shape index: {}]
  %s2 = inlined_call_operand.vmem [shape: f32[1,128], index: 2, kind: input, shape index: {}]
  %s3 = inlined_call_operand.vmem [shape: bf16[128,128], index: 3, kind: input, shape index: {}]
  %s4 = inlined_call_operand.vmem [shape: f32[1,128], index: 4, kind: input, shape index: {}]
  %s5 = inlined_call_operand.hbm [shape: f32[8,128], index: 5, kind: output, shape index: {}]
  %s6 = sld [smem:[#allocation0]]
  $region30: #{char_cnn_forward.3} parent=0
    _
  %s8 = ssub.s32 1, %s6
  %s9 = scalar_select 0, %s8, %s6
  $region1: #{char_cnn_forward.3} parent=0
    #allocation2 [shape = 'u8[4096]{0}', space=vmem, size = 0x1000, scoped, tag = 'output window, operand 0, single buffered']
    #allocation3 [shape = 's32[1]{0}', space=sflag, size = 0x4, scoped, tag = 'scoped memory for char_cnn_forward.3']
    %10 = vsyncpa [#allocation3], 0
    // Predicated region
    $region2: #{char_cnn_forward.3} parent=1 // pred_check
      _
    $region3: #{char_cnn_forward.3} parent=1 // pred_check_branch
      %12 = sbr.rel (0) target = $region5
    $region4: #{char_cnn_forward.3} parent=1 // pred_region
      _
    $region5: #{char_cnn_forward.3} parent=1 // pred_fallthru
      _
    // Predicated region
    $region6: #{char_cnn_forward.3} parent=1 // pred_check
      _
    $region7: #{char_cnn_forward.3} parent=1 // pred_check_branch
      %14 = sbr.rel (0) target = $region9
    $region8: #{char_cnn_forward.3} parent=1 // pred_region
      _
    $region9: #{char_cnn_forward.3} parent=1 // pred_fallthru
      _
    // Predicated region
    $region10: #{char_cnn_forward.3} parent=1 // pred_check
      _
    $region11: #{char_cnn_forward.3} parent=1 // pred_check_branch
      %16 = sbr.rel (0) target = $region13
    $region12: #{char_cnn_forward.3} parent=1 // pred_region
      _
    $region13: #{char_cnn_forward.3} parent=1 // pred_fallthru
      _
    // Predicated region
    $region14: #{char_cnn_forward.3} parent=1 // pred_check
      _
    $region15: #{char_cnn_forward.3} parent=1 // pred_check_branch
      %18 = sbr.rel (0) target = $region17
    $region16: #{char_cnn_forward.3} parent=1 // pred_region
      _
    $region17: #{char_cnn_forward.3} parent=1 // pred_fallthru
      _
    // Predicated region
    $region18: #{char_cnn_forward.3} parent=1 // pred_check
      _
    $region19: #{char_cnn_forward.3} parent=1 // pred_check_branch
      %20 = sbr.rel (0) target = $region21
    $region20: #{char_cnn_forward.3} parent=1 // pred_region
      _
    $region21: #{char_cnn_forward.3} parent=1 // pred_fallthru
      _
    %v22 = vld [vmem:[%s0] sm:$0xf]
    %v23 = vld [vmem:[%s1] sm:$0xf]
    %v24 = vld [vmem:[%s1 + $0x4] sm:$0xf]
    %v25 = vld [vmem:[%s1 + $0x8] sm:$0xf]
    %v26 = vld [vmem:[%s1 + $0xc] sm:$0xf]
    %v27 = vld [vmem:[%s1 + $0x10] sm:$0xf]
    %v28 = vld [vmem:[%s1 + $0x14] sm:$0xf]
    %v29 = vld [vmem:[%s1 + $0x18] sm:$0xf]
    %v30 = vld [vmem:[%s1 + $0x1c] sm:$0xf]
    %v31 = vld [vmem:[%s1 + $0x20] sm:$0xf]
    %v32 = vld [vmem:[%s1 + $0x24] sm:$0xf]
    %v33 = vld [vmem:[%s1 + $0x28] sm:$0xf]
    %v34 = vld [vmem:[%s1 + $0x2c] sm:$0xf]
    %v35 = vld [vmem:[%s1 + $0x30] sm:$0xf]
    %v36 = vld [vmem:[%s1 + $0x34] sm:$0xf]
    %v37 = vld [vmem:[%s1 + $0x38] sm:$0xf]
    %v38 = vld [vmem:[%s1 + $0x3c] sm:$0xf]
    %v39 = vld [vmem:[%s2] sm:$0x1]
    %v41 = vlaneseq
    %v42 = vshrl.u32 %v41, 7
    %v43 = vsub.s32 0, %v42
    %v44 = vrot.slane %v39, %v43
    %v62 = vunpack.c.l.b16 %v23
    %v63 = vunpack.c.l.b16 %v24
    %v64 = vunpack.c.l.b16 %v25
    %v65 = vunpack.c.l.b16 %v26
    %v66 = vunpack.c.l.b16 %v27
    %v67 = vunpack.c.l.b16 %v28
    %v68 = vunpack.c.l.b16 %v29
    %v69 = vunpack.c.l.b16 %v30
    %v70 = vunpack.c.l.b16 %v31
    %v71 = vunpack.c.l.b16 %v32
    %v72 = vunpack.c.l.b16 %v33
    %v73 = vunpack.c.l.b16 %v34
    %v74 = vunpack.c.l.b16 %v35
    %v75 = vunpack.c.l.b16 %v36
    %v76 = vunpack.c.l.b16 %v37
    %v77 = vunpack.c.l.b16 %v38
    %v78 = vpack.c.b16 %v63, %v62
    %v79 = vpack.c.b16 %v65, %v64
    %v80 = vpack.c.b16 %v67, %v66
    %v81 = vpack.c.b16 %v69, %v68
    %v82 = vpack.c.b16 %v71, %v70
    %v83 = vpack.c.b16 %v73, %v72
    %v84 = vpack.c.b16 %v75, %v74
    %v85 = vpack.c.b16 %v77, %v76
    %94 = vmatprep.subr.bf16.mxu0 0
    %95 = vmatpush1.bf16.msra.mxu0 %v78
    %96 = vmatprep.subr.bf16.mxu0 0
    %97 = vmatpush1.bf16.msra.mxu0 %v79
    %98 = vmatprep.subr.bf16.mxu0 0
    %99 = vmatpush1.bf16.msra.mxu0 %v80
    %100 = vmatprep.subr.bf16.mxu0 0
    %101 = vmatpush1.bf16.msra.mxu0 %v81
    %102 = vmatprep.subr.bf16.mxu0 0
    %103 = vmatpush1.bf16.msra.mxu0 %v82
    %104 = vmatprep.subr.bf16.mxu0 0
    %105 = vmatpush1.bf16.msra.mxu0 %v83
    %106 = vmatprep.subr.bf16.mxu0 0
    %107 = vmatpush1.bf16.msra.mxu0 %v84
    %108 = vmatprep.subr.bf16.mxu0 0
    %109 = vmatpush1.bf16.msra.mxu0 %v85
    %110 = vmatprep.subr.bf16.mxu0 0
    %111 = vmatpush1.bf16.msra.mxu0 0
    %112 = vmatprep.subr.bf16.mxu0 0
    %113 = vmatpush1.bf16.msra.mxu0 0
    %114 = vmatprep.subr.bf16.mxu0 0
    %115 = vmatpush1.bf16.msra.mxu0 0
    %116 = vmatprep.subr.bf16.mxu0 0
    %117 = vmatpush1.bf16.msra.mxu0 0
    %118 = vmatprep.subr.bf16.mxu0 0
    %119 = vmatpush1.bf16.msra.mxu0 0
    %120 = vmatprep.subr.bf16.mxu0 0
    %121 = vmatpush1.bf16.msra.mxu0 0
    %122 = vmatprep.subr.bf16.mxu0 0
    %123 = vmatpush1.bf16.msra.mxu0 0
    %124 = vmatprep.subr.bf16.mxu0 0
    %125 = vmatpush1.bf16.msra.mxu0 0
    %126 = vmatprep.mubr.bf16.mxu0 0
    %127 = vmatmul.mubr.bf16.gmra.mrb[0].mxu0 %v22
    %v128 = vpop.f32.mrb[0].mxu0
    %v129 = vadd.f32 %v44, %v128
    %v130 = vpop.f32.mrb[0].mxu0
    %v131 = vpop.f32.mrb[0].mxu0
    %v132 = vpop.f32.mrb[0].mxu0
    %133 = vdwg.mxu0
    %v134 = vmax.f32 %v129, 0.0
    %v135 = vpack.c.bf16 %v134, %v134
    %v136 = vld [vmem:[%s3] sm:$0xf]
    %v137 = vld [vmem:[%s3 + $0x4] sm:$0xf]
    %v138 = vld [vmem:[%s3 + $0x8] sm:$0xf]
    %v139 = vld [vmem:[%s3 + $0xc] sm:$0xf]
    %v140 = vld [vmem:[%s3 + $0x10] sm:$0xf]
    %v141 = vld [vmem:[%s3 + $0x14] sm:$0xf]
    %v142 = vld [vmem:[%s3 + $0x18] sm:$0xf]
    %v143 = vld [vmem:[%s3 + $0x1c] sm:$0xf]
    %v144 = vld [vmem:[%s3 + $0x20] sm:$0xf]
    %v145 = vld [vmem:[%s3 + $0x24] sm:$0xf]
    %v146 = vld [vmem:[%s3 + $0x28] sm:$0xf]
    %v147 = vld [vmem:[%s3 + $0x2c] sm:$0xf]
    %v148 = vld [vmem:[%s3 + $0x30] sm:$0xf]
    %v149 = vld [vmem:[%s3 + $0x34] sm:$0xf]
    %v150 = vld [vmem:[%s3 + $0x38] sm:$0xf]
    %v151 = vld [vmem:[%s3 + $0x3c] sm:$0xf]
    %v152 = vld [vmem:[%s4] sm:$0x1]
    %v154 = vlaneseq
    %v155 = vshrl.u32 %v154, 7
    %v156 = vsub.s32 0, %v155
    %v157 = vrot.slane %v152, %v156
    %v175 = vunpack.c.l.b16 %v136
    %v176 = vunpack.c.l.b16 %v137
    %v177 = vunpack.c.l.b16 %v138
    %v178 = vunpack.c.l.b16 %v139
    %v179 = vunpack.c.l.b16 %v140
    %v180 = vunpack.c.l.b16 %v141
    %v181 = vunpack.c.l.b16 %v142
    %v182 = vunpack.c.l.b16 %v143
    %v183 = vunpack.c.l.b16 %v144
    %v184 = vunpack.c.l.b16 %v145
    %v185 = vunpack.c.l.b16 %v146
    %v186 = vunpack.c.l.b16 %v147
    %v187 = vunpack.c.l.b16 %v148
    %v188 = vunpack.c.l.b16 %v149
    %v189 = vunpack.c.l.b16 %v150
    %v190 = vunpack.c.l.b16 %v151
    %v191 = vpack.c.b16 %v176, %v175
    %v192 = vpack.c.b16 %v178, %v177
    %v193 = vpack.c.b16 %v180, %v179
    %v194 = vpack.c.b16 %v182, %v181
    %v195 = vpack.c.b16 %v184, %v183
    %v196 = vpack.c.b16 %v186, %v185
    %v197 = vpack.c.b16 %v188, %v187
    %v198 = vpack.c.b16 %v190, %v189
    %207 = vmatprep.subr.bf16.mxu0 0
    %208 = vmatpush1.bf16.msra.mxu0 %v191
    %209 = vmatprep.subr.bf16.mxu0 0
    %210 = vmatpush1.bf16.msra.mxu0 %v192
    %211 = vmatprep.subr.bf16.mxu0 0
    %212 = vmatpush1.bf16.msra.mxu0 %v193
    %213 = vmatprep.subr.bf16.mxu0 0
    %214 = vmatpush1.bf16.msra.mxu0 %v194
    %215 = vmatprep.subr.bf16.mxu0 0
    %216 = vmatpush1.bf16.msra.mxu0 %v195
    %217 = vmatprep.subr.bf16.mxu0 0
    %218 = vmatpush1.bf16.msra.mxu0 %v196
    %219 = vmatprep.subr.bf16.mxu0 0
    %220 = vmatpush1.bf16.msra.mxu0 %v197
    %221 = vmatprep.subr.bf16.mxu0 0
    %222 = vmatpush1.bf16.msra.mxu0 %v198
    %223 = vmatprep.subr.bf16.mxu0 0
    %224 = vmatpush1.bf16.msra.mxu0 0
    %225 = vmatprep.subr.bf16.mxu0 0
    %226 = vmatpush1.bf16.msra.mxu0 0
    %227 = vmatprep.subr.bf16.mxu0 0
    %228 = vmatpush1.bf16.msra.mxu0 0
    %229 = vmatprep.subr.bf16.mxu0 0
    %230 = vmatpush1.bf16.msra.mxu0 0
    %231 = vmatprep.subr.bf16.mxu0 0
    %232 = vmatpush1.bf16.msra.mxu0 0
    %233 = vmatprep.subr.bf16.mxu0 0
    %234 = vmatpush1.bf16.msra.mxu0 0
    %235 = vmatprep.subr.bf16.mxu0 0
    %236 = vmatpush1.bf16.msra.mxu0 0
    %237 = vmatprep.subr.bf16.mxu0 0
    %238 = vmatpush1.bf16.msra.mxu0 0
    %239 = vmatprep.mubr.bf16.mxu0 0
    %240 = vmatmul.mubr.bf16.gmra.mrb[0].mxu0 %v135
    %v241 = vpop.f32.mrb[0].mxu0
    %v242 = vadd.f32 %v157, %v241
    %v243 = vpop.f32.mrb[0].mxu0
    %v244 = vpop.f32.mrb[0].mxu0
    %v245 = vpop.f32.mrb[0].mxu0
    %246 = vdwg.mxu0
    %247 = vst [vmem:[#allocation2] sm:$0xff] %v242
    // Predicated region
    $region22: #{char_cnn_forward.3} parent=1 // pred_check
      _
    $region23: #{char_cnn_forward.3} parent=1 // pred_check_branch
      %249 = sbr.rel (0) target = $region25
    $region24: #{char_cnn_forward.3} parent=1 // pred_region
      %s251 = ssub.s32 128, 128
      %252 = vsyncadd [#allocation3], %s251
      %s254 = sshll.u32 [#allocation2], 4
      %s255 = int_to_ptr.vmem [resolvable:$true] %s254
      %257 = dma.vmem_to_hbm [thread:$0]  %s255, 128, %s5, [#allocation3]
    $region25: #{char_cnn_forward.3} parent=1 // pred_fallthru
      _
    // Predicated region
    $region26: #{char_cnn_forward.3} parent=1 // pred_check
      _
    $region27: #{char_cnn_forward.3} parent=1 // pred_check_branch
      %259 = sbr.rel (0) target = $region29
    $region28: #{char_cnn_forward.3} parent=1 // pred_region
      %260 = dma.done [#allocation3], 128
    $region29: #{char_cnn_forward.3} parent=1 // pred_fallthru
      _
    %261 = vsyncpa [#allocation3], 1

// kernel: char_cnn_forward.2
$region0: #{char_cnn_forward.2}
  #allocation0 [shape = 'u32[]', space=smem, size = 0x4, offset = 0x4, fixed_abs, tag = 'smem constant byte address 0x4 - core index']
  #allocation1 [shape = 'u32[144,128]{1,0:T(1,128)}', space=vmem, size = 0x12000, scoped, tag = 'internal scratch']
  %s0 = inlined_call_operand.vmem [shape: bf16[32,8,32], index: 0, kind: input, shape index: {}]
  %s1 = inlined_call_operand.vmem [shape: bf16[64,32], index: 1, kind: input, shape index: {}]
  %s2 = inlined_call_operand.vmem [shape: f32[1,32], index: 2, kind: input, shape index: {}]
  %s3 = inlined_call_operand.vmem [shape: bf16[96,32], index: 3, kind: input, shape index: {}]
  %s4 = inlined_call_operand.vmem [shape: f32[1,32], index: 4, kind: input, shape index: {}]
  %s5 = inlined_call_operand.vmem [shape: bf16[128,32], index: 5, kind: input, shape index: {}]
  %s6 = inlined_call_operand.vmem [shape: f32[1,32], index: 6, kind: input, shape index: {}]
  %s7 = inlined_call_operand.vmem [shape: bf16[8,128], index: 7, kind: output, shape index: {0}]
  %s8 = inlined_call_operand.vmem [shape: f32[1,2,128], index: 8, kind: output, shape index: {1}]
  %9 = xla_tuple %s7, %s8
  %s10 = sld [smem:[#allocation0]]
  $region46: #{char_cnn_forward.2} parent=0
    _
  %s12 = ssub.s32 1, %s10
  %s13 = scalar_select 0, %s12, %s10
  // Predicated region
  $region2: #{char_cnn_forward.2} parent=0 // pred_check
    _
  $region3: #{char_cnn_forward.2} parent=0 // pred_check_branch
    %15 = sbr.rel (0) target = $region5
  $region4: #{char_cnn_forward.2} parent=0 // pred_region
    _
  $region5: #{char_cnn_forward.2} parent=0 // pred_fallthru
    _
  // Predicated region
  $region6: #{char_cnn_forward.2} parent=0 // pred_check
    _
  $region7: #{char_cnn_forward.2} parent=0 // pred_check_branch
    %17 = sbr.rel (0) target = $region9
  $region8: #{char_cnn_forward.2} parent=0 // pred_region
    _
  $region9: #{char_cnn_forward.2} parent=0 // pred_fallthru
    _
  // Predicated region
  $region10: #{char_cnn_forward.2} parent=0 // pred_check
    _
  $region11: #{char_cnn_forward.2} parent=0 // pred_check_branch
    %19 = sbr.rel (0) target = $region13
  $region12: #{char_cnn_forward.2} parent=0 // pred_region
    _
  $region13: #{char_cnn_forward.2} parent=0 // pred_fallthru
    _
  // Predicated region
  $region14: #{char_cnn_forward.2} parent=0 // pred_check
    _
  $region15: #{char_cnn_forward.2} parent=0 // pred_check_branch
    %21 = sbr.rel (0) target = $region17
  $region16: #{char_cnn_forward.2} parent=0 // pred_region
    _
  $region17: #{char_cnn_forward.2} parent=0 // pred_fallthru
    _
  // Predicated region
  $region18: #{char_cnn_forward.2} parent=0 // pred_check
    _
  $region19: #{char_cnn_forward.2} parent=0 // pred_check_branch
    %23 = sbr.rel (0) target = $region21
  $region20: #{char_cnn_forward.2} parent=0 // pred_region
    _
  $region21: #{char_cnn_forward.2} parent=0 // pred_fallthru
    _
  // Predicated region
  $region22: #{char_cnn_forward.2} parent=0 // pred_check
    _
  $region23: #{char_cnn_forward.2} parent=0 // pred_check_branch
    %25 = sbr.rel (0) target = $region25
  $region24: #{char_cnn_forward.2} parent=0 // pred_region
    _
  $region25: #{char_cnn_forward.2} parent=0 // pred_fallthru
    _
  // Predicated region
  $region26: #{char_cnn_forward.2} parent=0 // pred_check
    _
  $region27: #{char_cnn_forward.2} parent=0 // pred_check_branch
    %27 = sbr.rel (0) target = $region29
  $region28: #{char_cnn_forward.2} parent=0 // pred_region
    _
  $region29: #{char_cnn_forward.2} parent=0 // pred_fallthru
    _
  %v29 = vld [vmem:[%s0] sm:$0xf]
  %v30 = vld [vmem:[%s0 + $0x4] sm:$0xf]
  %v31 = vld [vmem:[%s0 + $0x8] sm:$0xf]
  %v32 = vld [vmem:[%s0 + $0xc] sm:$0xf]
  %v33 = vld [vmem:[%s0 + $0x10] sm:$0xf]
  %v34 = vld [vmem:[%s0 + $0x14] sm:$0xf]
  %v35 = vld [vmem:[%s0 + $0x18] sm:$0xf]
  %v36 = vld [vmem:[%s0 + $0x1c] sm:$0xf]
  %v37 = vld [vmem:[%s0 + $0x20] sm:$0xf]
  %v38 = vld [vmem:[%s0 + $0x24] sm:$0xf]
  %v39 = vld [vmem:[%s0 + $0x28] sm:$0xf]
  %v40 = vld [vmem:[%s0 + $0x2c] sm:$0xf]
  %v41 = vld [vmem:[%s0 + $0x30] sm:$0xf]
  %v42 = vld [vmem:[%s0 + $0x34] sm:$0xf]
  %v43 = vld [vmem:[%s0 + $0x38] sm:$0xf]
  %v44 = vld [vmem:[%s0 + $0x3c] sm:$0xf]
  %v45 = vld [vmem:[%s0 + $0x40] sm:$0xf]
  %v46 = vld [vmem:[%s0 + $0x44] sm:$0xf]
  %v47 = vld [vmem:[%s0 + $0x48] sm:$0xf]
  %v48 = vld [vmem:[%s0 + $0x4c] sm:$0xf]
  %v49 = vld [vmem:[%s0 + $0x50] sm:$0xf]
  %v50 = vld [vmem:[%s0 + $0x54] sm:$0xf]
  %v51 = vld [vmem:[%s0 + $0x58] sm:$0xf]
  %v52 = vld [vmem:[%s0 + $0x5c] sm:$0xf]
  %v53 = vld [vmem:[%s0 + $0x60] sm:$0xf]
  %v54 = vld [vmem:[%s0 + $0x64] sm:$0xf]
  %v55 = vld [vmem:[%s0 + $0x68] sm:$0xf]
  %v56 = vld [vmem:[%s0 + $0x6c] sm:$0xf]
  %v57 = vld [vmem:[%s0 + $0x70] sm:$0xf]
  %v58 = vld [vmem:[%s0 + $0x74] sm:$0xf]
  %v59 = vld [vmem:[%s0 + $0x78] sm:$0xf]
  %v60 = vld [vmem:[%s0 + $0x7c] sm:$0xf]
  %v61 = vunpack.c.l.bf16 %v29
  %v62 = vunpack.c.l.bf16 %v30
  %v63 = vunpack.c.l.bf16 %v31
  %v64 = vunpack.c.l.bf16 %v32
  %v65 = vunpack.c.l.bf16 %v33
  %v66 = vunpack.c.l.bf16 %v34
  %v67 = vunpack.c.l.bf16 %v35
  %v68 = vunpack.c.l.bf16 %v36
  %v69 = vunpack.c.l.bf16 %v37
  %v70 = vunpack.c.l.bf16 %v38
  %v71 = vunpack.c.l.bf16 %v39
  %v72 = vunpack.c.l.bf16 %v40
  %v73 = vunpack.c.l.bf16 %v41
  %v74 = vunpack.c.l.bf16 %v42
  %v75 = vunpack.c.l.bf16 %v43
  %v76 = vunpack.c.l.bf16 %v44
  %v77 = vunpack.c.l.bf16 %v45
  %v78 = vunpack.c.l.bf16 %v46
  %v79 = vunpack.c.l.bf16 %v47
  %v80 = vunpack.c.l.bf16 %v48
  %v81 = vunpack.c.l.bf16 %v49
  %v82 = vunpack.c.l.bf16 %v50
  %v83 = vunpack.c.l.bf16 %v51
  %v84 = vunpack.c.l.bf16 %v52
  %v85 = vunpack.c.l.bf16 %v53
  %v86 = vunpack.c.l.bf16 %v54
  %v87 = vunpack.c.l.bf16 %v55
  %v88 = vunpack.c.l.bf16 %v56
  %v89 = vunpack.c.l.bf16 %v57
  %v90 = vunpack.c.l.bf16 %v58
  %v91 = vunpack.c.l.bf16 %v59
  %v92 = vunpack.c.l.bf16 %v60
  %126 = vrot.lane.b32.xlu0 %v61, 32
  %v127 = vpop.permute.xlu0 %126
  %128 = vrot.lane.b32.xlu0 %v62, 32
  %v129 = vpop.permute.xlu0 %128
  %130 = vrot.lane.b32.xlu0 %v63, 32
  %v131 = vpop.permute.xlu0 %130
  %132 = vrot.lane.b32.xlu0 %v64, 32
  %v133 = vpop.permute.xlu0 %132
  %134 = vrot.lane.b32.xlu0 %v65, 32
  %v135 = vpop.permute.xlu0 %134
  %136 = vrot.lane.b32.xlu0 %v66, 32
  %v137 = vpop.permute.xlu0 %136
  %138 = vrot.lane.b32.xlu0 %v67, 32
  %v139 = vpop.permute.xlu0 %138
  %140 = vrot.lane.b32.xlu0 %v68, 32
  %v141 = vpop.permute.xlu0 %140
  %142 = vrot.lane.b32.xlu0 %v69, 32
  %v143 = vpop.permute.xlu0 %142
  %144 = vrot.lane.b32.xlu0 %v70, 32
  %v145 = vpop.permute.xlu0 %144
  %146 = vrot.lane.b32.xlu0 %v71, 32
  %v147 = vpop.permute.xlu0 %146
  %148 = vrot.lane.b32.xlu0 %v72, 32
  %v149 = vpop.permute.xlu0 %148
  %150 = vrot.lane.b32.xlu0 %v73, 32
  %v151 = vpop.permute.xlu0 %150
  %152 = vrot.lane.b32.xlu0 %v74, 32
  %v153 = vpop.permute.xlu0 %152
  %154 = vrot.lane.b32.xlu0 %v75, 32
  %v155 = vpop.permute.xlu0 %154
  %156 = vrot.lane.b32.xlu0 %v76, 32
  %v157 = vpop.permute.xlu0 %156
  %158 = vrot.lane.b32.xlu0 %v77, 32
  %v159 = vpop.permute.xlu0 %158
  %160 = vrot.lane.b32.xlu0 %v78, 32
  %v161 = vpop.permute.xlu0 %160
  %162 = vrot.lane.b32.xlu0 %v79, 32
  %v163 = vpop.permute.xlu0 %162
  %164 = vrot.lane.b32.xlu0 %v80, 32
  %v165 = vpop.permute.xlu0 %164
  %166 = vrot.lane.b32.xlu0 %v81, 32
  %v167 = vpop.permute.xlu0 %166
  %168 = vrot.lane.b32.xlu0 %v82, 32
  %v169 = vpop.permute.xlu0 %168
  %170 = vrot.lane.b32.xlu0 %v83, 32
  %v171 = vpop.permute.xlu0 %170
  %172 = vrot.lane.b32.xlu0 %v84, 32
  %v173 = vpop.permute.xlu0 %172
  %174 = vrot.lane.b32.xlu0 %v85, 32
  %v175 = vpop.permute.xlu0 %174
  %176 = vrot.lane.b32.xlu0 %v86, 32
  %v177 = vpop.permute.xlu0 %176
  %178 = vrot.lane.b32.xlu0 %v87, 32
  %v179 = vpop.permute.xlu0 %178
  %180 = vrot.lane.b32.xlu0 %v88, 32
  %v181 = vpop.permute.xlu0 %180
  %182 = vrot.lane.b32.xlu0 %v89, 32
  %v183 = vpop.permute.xlu0 %182
  %184 = vrot.lane.b32.xlu0 %v90, 32
  %v185 = vpop.permute.xlu0 %184
  %186 = vrot.lane.b32.xlu0 %v91, 32
  %v187 = vpop.permute.xlu0 %186
  %188 = vrot.lane.b32.xlu0 %v92, 32
  %v189 = vpop.permute.xlu0 %188
  %190 = vrot.lane.b32.xlu0 0.0, 32
  %v191 = vpop.permute.xlu0 %190
  %vm225 = vcmask 261120
  %v226 = vsel %vm225, 0.0, %v127
  %v227 = vsel %vm225, %v61, %v129
  %v228 = vsel %vm225, %v62, %v131
  %v229 = vsel %vm225, %v63, %v133
  %v230 = vsel %vm225, %v64, %v135
  %v231 = vsel %vm225, %v65, %v137
  %v232 = vsel %vm225, %v66, %v139
  %v233 = vsel %vm225, %v67, %v141
  %v234 = vsel %vm225, %v68, %v143
  %v235 = vsel %vm225, %v69, %v145
  %v236 = vsel %vm225, %v70, %v147
  %v237 = vsel %vm225, %v71, %v149
  %v238 = vsel %vm225, %v72, %v151
  %v239 = vsel %vm225, %v73, %v153
  %v240 = vsel %vm225, %v74, %v155
  %v241 = vsel %vm225, %v75, %v157
  %v242 = vsel %vm225, %v76, %v159
  %v243 = vsel %vm225, %v77, %v161
  %v244 = vsel %vm225, %v78, %v163
  %v245 = vsel %vm225, %v79, %v165
  %v246 = vsel %vm225, %v80, %v167
  %v247 = vsel %vm225, %v81, %v169
  %v248 = vsel %vm225, %v82, %v171
  %v249 = vsel %vm225, %v83, %v173
  %v250 = vsel %vm225, %v84, %v175
  %v251 = vsel %vm225, %v85, %v177
  %v252 = vsel %vm225, %v86, %v179
  %v253 = vsel %vm225, %v87, %v181
  %v254 = vsel %vm225, %v88, %v183
  %v255 = vsel %vm225, %v89, %v185
  %v256 = vsel %vm225, %v90, %v187
  %v257 = vsel %vm225, %v91, %v189
  %v258 = vsel %vm225, %v92, %v191
  %v259 = vpack.c.bf16 %v227, %v226
  %v260 = vpack.c.bf16 %v229, %v228
  %v261 = vpack.c.bf16 %v231, %v230
  %v262 = vpack.c.bf16 %v233, %v232
  %v263 = vpack.c.bf16 %v235, %v234
  %v264 = vpack.c.bf16 %v237, %v236
  %v265 = vpack.c.bf16 %v239, %v238
  %v266 = vpack.c.bf16 %v241, %v240
  %v267 = vpack.c.bf16 %v243, %v242
  %v268 = vpack.c.bf16 %v245, %v244
  %v269 = vpack.c.bf16 %v247, %v246
  %v270 = vpack.c.bf16 %v249, %v248
  %v271 = vpack.c.bf16 %v251, %v250
  %v272 = vpack.c.bf16 %v253, %v252
  %v273 = vpack.c.bf16 %v255, %v254
  %v274 = vpack.c.bf16 %v257, %v256
  %v275 = vpack.c.bf16 %v258, %v258
  %v276 = vld [vmem:[%s1] sm:$0xf]
  %v277 = vld [vmem:[%s1 + $0x4] sm:$0xf]
  %v278 = vld [vmem:[%s1 + $0x8] sm:$0xf]
  %v279 = vld [vmem:[%s1 + $0xc] sm:$0xf]
  %v280 = vld [vmem:[%s1 + $0x10] sm:$0xf]
  %v281 = vld [vmem:[%s1 + $0x14] sm:$0xf]
  %v282 = vld [vmem:[%s1 + $0x18] sm:$0xf]
  %v283 = vld [vmem:[%s1 + $0x1c] sm:$0xf]
  %v284 = vld [vmem:[%s2] sm:$0x1]
  %v286 = vlaneseq
  %v287 = vshrl.u32 %v286, 7
  %v288 = vsub.s32 0, %v287
  %v289 = vrot.slane %v284, %v288
  %v299 = vunpack.c.l.b16 %v276
  %v300 = vunpack.c.l.b16 %v277
  %v301 = vunpack.c.l.b16 %v278
  %v302 = vunpack.c.l.b16 %v279
  %v303 = vunpack.c.l.b16 %v280
  %v304 = vunpack.c.l.b16 %v281
  %v305 = vunpack.c.l.b16 %v282
  %v306 = vunpack.c.l.b16 %v283
  %v307 = vpack.c.b16 %v300, %v299
  %v308 = vpack.c.b16 %v302, %v301
  %v309 = vpack.c.b16 %v304, %v303
  %v310 = vpack.c.b16 %v306, %v305
  %vm315 = vcmask 523264
  %v317 = vsel %vm315, %v259, 0
  %v320 = vsel %vm315, %v260, 0
  %v323 = vsel %vm315, %v261, 0
  %v326 = vsel %vm315, %v262, 0
  %v329 = vsel %vm315, %v263, 0
  %v332 = vsel %vm315, %v264, 0
  %v335 = vsel %vm315, %v265, 0
  %v338 = vsel %vm315, %v266, 0
  %v341 = vsel %vm315, %v267, 0
  %v344 = vsel %vm315, %v268, 0
  %v347 = vsel %vm315, %v269, 0
  %v350 = vsel %vm315, %v270, 0
  %v353 = vsel %vm315, %v271, 0
  %v356 = vsel %vm315, %v272, 0
  %v359 = vsel %vm315, %v273, 0
  %v362 = vsel %vm315, %v274, 0
  %v365 = vsel %vm315, %v275, 0
  %367 = vmatprep.subr.bf16.mxu0 0
  %368 = vmatpush1.bf16.msra.mxu0 %v307
  %369 = vmatprep.subr.bf16.mxu0 0
  %370 = vmatpush1.bf16.msra.mxu0 %v308
  %371 = vmatprep.subr.bf16.mxu0 0
  %372 = vmatpush1.bf16.msra.mxu0 %v309
  %373 = vmatprep.subr.bf16.mxu0 0
  %374 = vmatpush1.bf16.msra.mxu0 %v310
  %375 = vmatprep.subr.bf16.mxu0 0
  %376 = vmatpush1.bf16.msra.mxu0 0
  %377 = vmatprep.subr.bf16.mxu0 0
  %378 = vmatpush1.bf16.msra.mxu0 0
  %379 = vmatprep.subr.bf16.mxu0 0
  %380 = vmatpush1.bf16.msra.mxu0 0
  %381 = vmatprep.subr.bf16.mxu0 0
  %382 = vmatpush1.bf16.msra.mxu0 0
  %383 = vmatprep.subr.bf16.mxu0 0
  %384 = vmatpush1.bf16.msra.mxu0 0
  %385 = vmatprep.subr.bf16.mxu0 0
  %386 = vmatpush1.bf16.msra.mxu0 0
  %387 = vmatprep.subr.bf16.mxu0 0
  %388 = vmatpush1.bf16.msra.mxu0 0
  %389 = vmatprep.subr.bf16.mxu0 0
  %390 = vmatpush1.bf16.msra.mxu0 0
  %391 = vmatprep.subr.bf16.mxu0 0
  %392 = vmatpush1.bf16.msra.mxu0 0
  %393 = vmatprep.subr.bf16.mxu0 0
  %394 = vmatpush1.bf16.msra.mxu0 0
  %395 = vmatprep.subr.bf16.mxu0 0
  %396 = vmatpush1.bf16.msra.mxu0 0
  %397 = vmatprep.subr.bf16.mxu0 0
  %398 = vmatpush1.bf16.msra.mxu0 0
  %399 = vmatprep.mubr.bf16.mxu0 0
  %400 = vmatmul.mubr.bf16.gmra.mrb[0].mxu0 %v317
  %v401 = vpop.f32.mrb[0].mxu0
  %v402 = vadd.f32 %v289, %v401
  %v403 = vpop.f32.mrb[0].mxu0
  %v404 = vpop.f32.mrb[0].mxu0
  %v405 = vadd.f32 %v289, %v404
  %v406 = vpop.f32.mrb[0].mxu0
  %407 = vmatprep.mubr.bf16.mxu0 0
  %408 = vmatmul.mubr.bf16.gmra.mrb[0].mxu0 %v320
  %v409 = vpop.f32.mrb[0].mxu0
  %v410 = vadd.f32 %v289, %v409
  %v411 = vpop.f32.mrb[0].mxu0
  %v412 = vpop.f32.mrb[0].mxu0
  %v413 = vadd.f32 %v289, %v412
  %v414 = vpop.f32.mrb[0].mxu0
  %415 = vmatprep.mubr.bf16.mxu0 0
  %416 = vmatmul.mubr.bf16.gmra.mrb[0].mxu0 %v323
  %v417 = vpop.f32.mrb[0].mxu0
  %v418 = vadd.f32 %v289, %v417
  %v419 = vpop.f32.mrb[0].mxu0
  %v420 = vpop.f32.mrb[0].mxu0
  %v421 = vadd.f32 %v289, %v420
  %v422 = vpop.f32.mrb[0].mxu0
  %423 = vmatprep.mubr.bf16.mxu0 0
  %424 = vmatmul.mubr.bf16.gmra.mrb[0].mxu0 %v326
  %v425 = vpop.f32.mrb[0].mxu0
  %v426 = vadd.f32 %v289, %v425
  %v427 = vpop.f32.mrb[0].mxu0
  %v428 = vpop.f32.mrb[0].mxu0
  %v429 = vadd.f32 %v289, %v428
  %v430 = vpop.f32.mrb[0].mxu0
  %431 = vmatprep.mubr.bf16.mxu0 0
  %432 = vmatmul.mubr.bf16.gmra.mrb[0].mxu0 %v329
  %v433 = vpop.f32.mrb[0].mxu0
  %v434 = vadd.f32 %v289, %v433
  %v435 = vpop.f32.mrb[0].mxu0
  %v436 = vpop.f32.mrb[0].mxu0
  %v437 = vadd.f32 %v289, %v436
  %v438 = vpop.f32.mrb[0].mxu0
  %439 = vmatprep.mubr.bf16.mxu0 0
  %440 = vmatmul.mubr.bf16.gmra.mrb[0].mxu0 %v332
  %v441 = vpop.f32.mrb[0].mxu0
  %v442 = vadd.f32 %v289, %v441
  %v443 = vpop.f32.mrb[0].mxu0
  %v444 = vpop.f32.mrb[0].mxu0
  %v445 = vadd.f32 %v289, %v444
  %v446 = vpop.f32.mrb[0].mxu0
  %447 = vmatprep.mubr.bf16.mxu0 0
  %448 = vmatmul.mubr.bf16.gmra.mrb[0].mxu0 %v335
  %v449 = vpop.f32.mrb[0].mxu0
  %v450 = vadd.f32 %v289, %v449
  %v451 = vpop.f32.mrb[0].mxu0
  %v452 = vpop.f32.mrb[0].mxu0
  %v453 = vadd.f32 %v289, %v452
  %v454 = vpop.f32.mrb[0].mxu0
  %455 = vmatprep.mubr.bf16.mxu0 0
  %456 = vmatmul.mubr.bf16.gmra.mrb[0].mxu0 %v338
  %v457 = vpop.f32.mrb[0].mxu0
  %v458 = vadd.f32 %v289, %v457
  %v459 = vpop.f32.mrb[0].mxu0
  %v460 = vpop.f32.mrb[0].mxu0
  %v461 = vadd.f32 %v289, %v460
  %v462 = vpop.f32.mrb[0].mxu0
  %463 = vmatprep.mubr.bf16.mxu0 0
  %464 = vmatmul.mubr.bf16.gmra.mrb[0].mxu0 %v341
  %v465 = vpop.f32.mrb[0].mxu0
  %v466 = vadd.f32 %v289, %v465
  %v467 = vpop.f32.mrb[0].mxu0
  %v468 = vpop.f32.mrb[0].mxu0
  %v469 = vadd.f32 %v289, %v468
  %v470 = vpop.f32.mrb[0].mxu0
  %471 = vmatprep.mubr.bf16.mxu0 0
  %472 = vmatmul.mubr.bf16.gmra.mrb[0].mxu0 %v344
  %v473 = vpop.f32.mrb[0].mxu0
  %v474 = vadd.f32 %v289, %v473
  %v475 = vpop.f32.mrb[0].mxu0
  %v476 = vpop.f32.mrb[0].mxu0
  %v477 = vadd.f32 %v289, %v476
  %v478 = vpop.f32.mrb[0].mxu0
  %479 = vmatprep.mubr.bf16.mxu0 0
  %480 = vmatmul.mubr.bf16.gmra.mrb[0].mxu0 %v347
  %v481 = vpop.f32.mrb[0].mxu0
  %v482 = vadd.f32 %v289, %v481
  %v483 = vpop.f32.mrb[0].mxu0
  %v484 = vpop.f32.mrb[0].mxu0
  %v485 = vadd.f32 %v289, %v484
  %v486 = vpop.f32.mrb[0].mxu0
  %487 = vmatprep.mubr.bf16.mxu0 0
  %488 = vmatmul.mubr.bf16.gmra.mrb[0].mxu0 %v350
  %v489 = vpop.f32.mrb[0].mxu0
  %v490 = vadd.f32 %v289, %v489
  %v491 = vpop.f32.mrb[0].mxu0
  %v492 = vpop.f32.mrb[0].mxu0
  %v493 = vadd.f32 %v289, %v492
  %v494 = vpop.f32.mrb[0].mxu0
  %495 = vmatprep.mubr.bf16.mxu0 0
  %496 = vmatmul.mubr.bf16.gmra.mrb[0].mxu0 %v353
  %v497 = vpop.f32.mrb[0].mxu0
  %v498 = vadd.f32 %v289, %v497
  %v499 = vpop.f32.mrb[0].mxu0
  %v500 = vpop.f32.mrb[0].mxu0
  %v501 = vadd.f32 %v289, %v500
  %v502 = vpop.f32.mrb[0].mxu0
  %503 = vmatprep.mubr.bf16.mxu0 0
  %504 = vmatmul.mubr.bf16.gmra.mrb[0].mxu0 %v356
  %v505 = vpop.f32.mrb[0].mxu0
  %v506 = vadd.f32 %v289, %v505
  %v507 = vpop.f32.mrb[0].mxu0
  %v508 = vpop.f32.mrb[0].mxu0
  %v509 = vadd.f32 %v289, %v508
  %v510 = vpop.f32.mrb[0].mxu0
  %511 = vmatprep.mubr.bf16.mxu0 0
  %512 = vmatmul.mubr.bf16.gmra.mrb[0].mxu0 %v359
  %v513 = vpop.f32.mrb[0].mxu0
  %v514 = vadd.f32 %v289, %v513
  %v515 = vpop.f32.mrb[0].mxu0
  %v516 = vpop.f32.mrb[0].mxu0
  %v517 = vadd.f32 %v289, %v516
  %v518 = vpop.f32.mrb[0].mxu0
  %519 = vmatprep.mubr.bf16.mxu0 0
  %520 = vmatmul.mubr.bf16.gmra.mrb[0].mxu0 %v362
  %v521 = vpop.f32.mrb[0].mxu0
  %v522 = vadd.f32 %v289, %v521
  %v523 = vpop.f32.mrb[0].mxu0
  %v524 = vpop.f32.mrb[0].mxu0
  %v525 = vadd.f32 %v289, %v524
  %v526 = vpop.f32.mrb[0].mxu0
  %527 = vmatprep.mubr.bf16.mxu0 0
  %528 = vmatmul.mubr.bf16.gmra.mrb[0].mxu0 %v365
  %v529 = vpop.f32.mrb[0].mxu0
  %v530 = vpop.f32.mrb[0].mxu0
  %v531 = vpop.f32.mrb[0].mxu0
  %v532 = vpop.f32.mrb[0].mxu0
  %533 = vdwg.mxu0
  %v534 = vmax.f32 %v402, 0.0
  %v535 = vmax.f32 %v405, 0.0
  %v536 = vmax.f32 %v410, 0.0
  %v537 = vmax.f32 %v413, 0.0
  %v538 = vmax.f32 %v418, 0.0
  %v539 = vmax.f32 %v421, 0.0
  %v540 = vmax.f32 %v426, 0.0
  %v541 = vmax.f32 %v429, 0.0
  %v542 = vmax.f32 %v434, 0.0
  %v543 = vmax.f32 %v437, 0.0
  %v544 = vmax.f32 %v442, 0.0
  %v545 = vmax.f32 %v445, 0.0
  %v546 = vmax.f32 %v450, 0.0
  %v547 = vmax.f32 %v453, 0.0
  %v548 = vmax.f32 %v458, 0.0
  %v549 = vmax.f32 %v461, 0.0
  %v550 = vmax.f32 %v466, 0.0
  %v551 = vmax.f32 %v469, 0.0
  %v552 = vmax.f32 %v474, 0.0
  %v553 = vmax.f32 %v477, 0.0
  %v554 = vmax.f32 %v482, 0.0
  %v555 = vmax.f32 %v485, 0.0
  %v556 = vmax.f32 %v490, 0.0
  %v557 = vmax.f32 %v493, 0.0
  %v558 = vmax.f32 %v498, 0.0
  %v559 = vmax.f32 %v501, 0.0
  %v560 = vmax.f32 %v506, 0.0
  %v561 = vmax.f32 %v509, 0.0
  %v562 = vmax.f32 %v514, 0.0
  %v563 = vmax.f32 %v517, 0.0
  %v564 = vmax.f32 %v522, 0.0
  %v565 = vmax.f32 %v525, 0.0
  %v566 = vmax.f32 %v534, %v535
  %v567 = vmax.f32 %v536, %v537
  %v568 = vmax.f32 %v538, %v539
  %v569 = vmax.f32 %v540, %v541
  %v570 = vmax.f32 %v542, %v543
  %v571 = vmax.f32 %v544, %v545
  %v572 = vmax.f32 %v546, %v547
  %v573 = vmax.f32 %v548, %v549
  %v574 = vmax.f32 %v550, %v551
  %v575 = vmax.f32 %v552, %v553
  %v576 = vmax.f32 %v554, %v555
  %v577 = vmax.f32 %v556, %v557
  %v578 = vmax.f32 %v558, %v559
  %v579 = vmax.f32 %v560, %v561
  %v580 = vmax.f32 %v562, %v563
  %v581 = vmax.f32 %v564, %v565
  %598 = vrot.lane.b32.xlu0 %v566, 32
  %v599 = vpop.permute.xlu0 %598
  %600 = vrot.lane.b32.xlu0 %v567, 32
  %v601 = vpop.permute.xlu0 %600
  %602 = vrot.lane.b32.xlu0 %v568, 32
  %v603 = vpop.permute.xlu0 %602
  %604 = vrot.lane.b32.xlu0 %v569, 32
  %v605 = vpop.permute.xlu0 %604
  %606 = vrot.lane.b32.xlu0 %v570, 32
  %v607 = vpop.permute.xlu0 %606
  %608 = vrot.lane.b32.xlu0 %v571, 32
  %v609 = vpop.permute.xlu0 %608
  %610 = vrot.lane.b32.xlu0 %v572, 32
  %v611 = vpop.permute.xlu0 %610
  %612 = vrot.lane.b32.xlu0 %v573, 32
  %v613 = vpop.permute.xlu0 %612
  %614 = vrot.lane.b32.xlu0 %v574, 32
  %v615 = vpop.permute.xlu0 %614
  %616 = vrot.lane.b32.xlu0 %v575, 32
  %v617 = vpop.permute.xlu0 %616
  %618 = vrot.lane.b32.xlu0 %v576, 32
  %v619 = vpop.permute.xlu0 %618
  %620 = vrot.lane.b32.xlu0 %v577, 32
  %v621 = vpop.permute.xlu0 %620
  %622 = vrot.lane.b32.xlu0 %v578, 32
  %v623 = vpop.permute.xlu0 %622
  %624 = vrot.lane.b32.xlu0 %v579, 32
  %v625 = vpop.permute.xlu0 %624
  %626 = vrot.lane.b32.xlu0 %v580, 32
  %v627 = vpop.permute.xlu0 %626
  %628 = vrot.lane.b32.xlu0 %v581, 32
  %v629 = vpop.permute.xlu0 %628
  %646 = vrot.lane.b32.xlu0 %v567, 64
  %v647 = vpop.permute.xlu0 %646
  %648 = vrot.lane.b32.xlu0 %v568, 64
  %v649 = vpop.permute.xlu0 %648
  %650 = vrot.lane.b32.xlu0 %v569, 64
  %v651 = vpop.permute.xlu0 %650
  %652 = vrot.lane.b32.xlu0 %v570, 64
  %v653 = vpop.permute.xlu0 %652
  %654 = vrot.lane.b32.xlu0 %v571, 64
  %v655 = vpop.permute.xlu0 %654
  %656 = vrot.lane.b32.xlu0 %v572, 64
  %v657 = vpop.permute.xlu0 %656
  %658 = vrot.lane.b32.xlu0 %v573, 64
  %v659 = vpop.permute.xlu0 %658
  %660 = vrot.lane.b32.xlu0 %v574, 64
  %v661 = vpop.permute.xlu0 %660
  %662 = vrot.lane.b32.xlu0 %v575, 64
  %v663 = vpop.permute.xlu0 %662
  %664 = vrot.lane.b32.xlu0 %v576, 64
  %v665 = vpop.permute.xlu0 %664
  %666 = vrot.lane.b32.xlu0 %v577, 64
  %v667 = vpop.permute.xlu0 %666
  %668 = vrot.lane.b32.xlu0 %v578, 64
  %v669 = vpop.permute.xlu0 %668
  %670 = vrot.lane.b32.xlu0 %v579, 64
  %v671 = vpop.permute.xlu0 %670
  %672 = vrot.lane.b32.xlu0 %v580, 64
  %v673 = vpop.permute.xlu0 %672
  %674 = vrot.lane.b32.xlu0 %v581, 64
  %v675 = vpop.permute.xlu0 %674
  %676 = vrot.lane.b32.xlu0 0.0, 64
  %v677 = vpop.permute.xlu0 %676
  %v694 = vsel %vm225, 0.0, %v599
  %v695 = vsel %vm225, %v566, %v601
  %v696 = vsel %vm225, %v567, %v603
  %v697 = vsel %vm225, %v568, %v605
  %v698 = vsel %vm225, %v569, %v607
  %v699 = vsel %vm225, %v570, %v609
  %v700 = vsel %vm225, %v571, %v611
  %v701 = vsel %vm225, %v572, %v613
  %v702 = vsel %vm225, %v573, %v615
  %v703 = vsel %vm225, %v574, %v617
  %v704 = vsel %vm225, %v575, %v619
  %v705 = vsel %vm225, %v576, %v621
  %v706 = vsel %vm225, %v577, %v623
  %v707 = vsel %vm225, %v578, %v625
  %v708 = vsel %vm225, %v579, %v627
  %v709 = vsel %vm225, %v580, %v629
  %v710 = vsel %vm315, %v694, %v647
  %v711 = vsel %vm315, %v695, %v649
  %v712 = vsel %vm315, %v696, %v651
  %v713 = vsel %vm315, %v697, %v653
  %v714 = vsel %vm315, %v698, %v655
  %v715 = vsel %vm315, %v699, %v657
  %v716 = vsel %vm315, %v700, %v659
  %v717 = vsel %vm315, %v701, %v661
  %v718 = vsel %vm315, %v702, %v663
  %v719 = vsel %vm315, %v703, %v665
  %v720 = vsel %vm315, %v704, %v667
  %v721 = vsel %vm315, %v705, %v669
  %v722 = vsel %vm315, %v706, %v671
  %v723 = vsel %vm315, %v707, %v673
  %v724 = vsel %vm315, %v708, %v675
  %v725 = vsel %vm315, %v709, %v677
  %v726 = vpack.c.bf16 %v711, %v710
  %v727 = vpack.c.bf16 %v713, %v712
  %v728 = vpack.c.bf16 %v715, %v714
  %v729 = vpack.c.bf16 %v717, %v716
  %v730 = vpack.c.bf16 %v719, %v718
  %v731 = vpack.c.bf16 %v721, %v720
  %v732 = vpack.c.bf16 %v723, %v722
  %v733 = vpack.c.bf16 %v725, %v724
  %v734 = vld [vmem:[%s3] sm:$0xf]
  %v735 = vld [vmem:[%s3 + $0x4] sm:$0xf]
  %v736 = vld [vmem:[%s3 + $0x8] sm:$0xf]
  %v737 = vld [vmem:[%s3 + $0xc] sm:$0xf]
  %v738 = vld [vmem:[%s3 + $0x10] sm:$0xf]
  %v739 = vld [vmem:[%s3 + $0x14] sm:$0xf]
  %v740 = vld [vmem:[%s3 + $0x18] sm:$0xf]
  %v741 = vld [vmem:[%s3 + $0x1c] sm:$0xf]
  %v742 = vld [vmem:[%s3 + $0x20] sm:$0xf]
  %v743 = vld [vmem:[%s3 + $0x24] sm:$0xf]
  %v744 = vld [vmem:[%s3 + $0x28] sm:$0xf]
  %v745 = vld [vmem:[%s3 + $0x2c] sm:$0xf]
  %v746 = vld [vmem:[%s4] sm:$0x1]
  %v748 = vlaneseq
  %v749 = vshrl.u32 %v748, 7
  %v750 = vsub.s32 0, %v749
  %v751 = vrot.slane %v746, %v750
  %v765 = vunpack.c.l.b16 %v734
  %v766 = vunpack.c.l.b16 %v735
  %v767 = vunpack.c.l.b16 %v736
  %v768 = vunpack.c.l.b16 %v737
  %v769 = vunpack.c.l.b16 %v738
  %v770 = vunpack.c.l.b16 %v739
  %v771 = vunpack.c.l.b16 %v740
  %v772 = vunpack.c.l.b16 %v741
  %v773 = vunpack.c.l.b16 %v742
  %v774 = vunpack.c.l.b16 %v743
  %v775 = vunpack.c.l.b16 %v744
  %v776 = vunpack.c.l.b16 %v745
  %v777 = vpack.c.b16 %v766, %v765
  %v778 = vpack.c.b16 %v768, %v767
  %v779 = vpack.c.b16 %v770, %v769
  %v780 = vpack.c.b16 %v772, %v771
  %v781 = vpack.c.b16 %v774, %v773
  %v782 = vpack.c.b16 %v776, %v775
  %vm789 = vcmask 785408
  %v791 = vsel %vm789, %v726, 0
  %v794 = vsel %vm789, %v727, 0
  %v797 = vsel %vm789, %v728, 0
  %v800 = vsel %vm789, %v729, 0
  %v803 = vsel %vm789, %v730, 0
  %v806 = vsel %vm789, %v731, 0
  %v809 = vsel %vm789, %v732, 0
  %v812 = vsel %vm789, %v733, 0
  %814 = vmatprep.subr.bf16.mxu0 0
  %815 = vmatpush1.bf16.msra.mxu0 %v777
  %816 = vmatprep.subr.bf16.mxu0 0
  %817 = vmatpush1.bf16.msra.mxu0 %v778
  %818 = vmatprep.subr.bf16.mxu0 0
  %819 = vmatpush1.bf16.msra.mxu0 %v779
  %820 = vmatprep.subr.bf16.mxu0 0
  %821 = vmatpush1.bf16.msra.mxu0 %v780
  %822 = vmatprep.subr.bf16.mxu0 0
  %823 = vmatpush1.bf16.msra.mxu0 %v781
  %824 = vmatprep.subr.bf16.mxu0 0
  %825 = vmatpush1.bf16.msra.mxu0 %v782
  %826 = vmatprep.subr.bf16.mxu0 0
  %827 = vmatpush1.bf16.msra.mxu0 0
  %828 = vmatprep.subr.bf16.mxu0 0
  %829 = vmatpush1.bf16.msra.mxu0 0
  %830 = vmatprep.subr.bf16.mxu0 0
  %831 = vmatpush1.bf16.msra.mxu0 0
  %832 = vmatprep.subr.bf16.mxu0 0
  %833 = vmatpush1.bf16.msra.mxu0 0
  %834 = vmatprep.subr.bf16.mxu0 0
  %835 = vmatpush1.bf16.msra.mxu0 0
  %836 = vmatprep.subr.bf16.mxu0 0
  %837 = vmatpush1.bf16.msra.mxu0 0
  %838 = vmatprep.subr.bf16.mxu0 0
  %839 = vmatpush1.bf16.msra.mxu0 0
  %840 = vmatprep.subr.bf16.mxu0 0
  %841 = vmatpush1.bf16.msra.mxu0 0
  %842 = vmatprep.subr.bf16.mxu0 0
  %843 = vmatpush1.bf16.msra.mxu0 0
  %844 = vmatprep.subr.bf16.mxu0 0
  %845 = vmatpush1.bf16.msra.mxu0 0
  %846 = vmatprep.mubr.bf16.mxu0 0
  %847 = vmatmul.mubr.bf16.gmra.mrb[0].mxu0 %v791
  %v848 = vpop.f32.mrb[0].mxu0
  %v849 = vadd.f32 %v751, %v848
  %v850 = vpop.f32.mrb[0].mxu0
  %v851 = vpop.f32.mrb[0].mxu0
  %v852 = vadd.f32 %v751, %v851
  %v853 = vpop.f32.mrb[0].mxu0
  %854 = vmatprep.mubr.bf16.mxu0 0
  %855 = vmatmul.mubr.bf16.gmra.mrb[0].mxu0 %v794
  %v856 = vpop.f32.mrb[0].mxu0
  %v857 = vadd.f32 %v751, %v856
  %v858 = vpop.f32.mrb[0].mxu0
  %v859 = vpop.f32.mrb[0].mxu0
  %v860 = vadd.f32 %v751, %v859
  %v861 = vpop.f32.mrb[0].mxu0
  %862 = vmatprep.mubr.bf16.mxu0 0
  %863 = vmatmul.mubr.bf16.gmra.mrb[0].mxu0 %v797
  %v864 = vpop.f32.mrb[0].mxu0
  %v865 = vadd.f32 %v751, %v864
  %v866 = vpop.f32.mrb[0].mxu0
  %v867 = vpop.f32.mrb[0].mxu0
  %v868 = vadd.f32 %v751, %v867
  %v869 = vpop.f32.mrb[0].mxu0
  %870 = vmatprep.mubr.bf16.mxu0 0
  %871 = vmatmul.mubr.bf16.gmra.mrb[0].mxu0 %v800
  %v872 = vpop.f32.mrb[0].mxu0
  %v873 = vadd.f32 %v751, %v872
  %v874 = vpop.f32.mrb[0].mxu0
  %v875 = vpop.f32.mrb[0].mxu0
  %v876 = vadd.f32 %v751, %v875
  %v877 = vpop.f32.mrb[0].mxu0
  %878 = vmatprep.mubr.bf16.mxu0 0
  %879 = vmatmul.mubr.bf16.gmra.mrb[0].mxu0 %v803
  %v880 = vpop.f32.mrb[0].mxu0
  %v881 = vadd.f32 %v751, %v880
  %v882 = vpop.f32.mrb[0].mxu0
  %v883 = vpop.f32.mrb[0].mxu0
  %v884 = vadd.f32 %v751, %v883
  %v885 = vpop.f32.mrb[0].mxu0
  %886 = vmatprep.mubr.bf16.mxu0 0
  %887 = vmatmul.mubr.bf16.gmra.mrb[0].mxu0 %v806
  %v888 = vpop.f32.mrb[0].mxu0
  %v889 = vadd.f32 %v751, %v888
  %v890 = vpop.f32.mrb[0].mxu0
  %v891 = vpop.f32.mrb[0].mxu0
  %v892 = vadd.f32 %v751, %v891
  %v893 = vpop.f32.mrb[0].mxu0
  %894 = vmatprep.mubr.bf16.mxu0 0
  %895 = vmatmul.mubr.bf16.gmra.mrb[0].mxu0 %v809
  %v896 = vpop.f32.mrb[0].mxu0
  %v897 = vadd.f32 %v751, %v896
  %v898 = vpop.f32.mrb[0].mxu0
  %v899 = vpop.f32.mrb[0].mxu0
  %v900 = vadd.f32 %v751, %v899
  %v901 = vpop.f32.mrb[0].mxu0
  %902 = vmatprep.mubr.bf16.mxu0 0
  %903 = vmatmul.mubr.bf16.gmra.mrb[0].mxu0 %v812
  %v904 = vpop.f32.mrb[0].mxu0
  %v905 = vadd.f32 %v751, %v904
  %v906 = vpop.f32.mrb[0].mxu0
  %v907 = vpop.f32.mrb[0].mxu0
  %v908 = vadd.f32 %v751, %v907
  %v909 = vpop.f32.mrb[0].mxu0
  %910 = vdwg.mxu0
  %v911 = vmax.f32 %v849, 0.0
  %v912 = vmax.f32 %v852, 0.0
  %v913 = vmax.f32 %v857, 0.0
  %v914 = vmax.f32 %v860, 0.0
  %v915 = vmax.f32 %v865, 0.0
  %v916 = vmax.f32 %v868, 0.0
  %v917 = vmax.f32 %v873, 0.0
  %v918 = vmax.f32 %v876, 0.0
  %v919 = vmax.f32 %v881, 0.0
  %v920 = vmax.f32 %v884, 0.0
  %v921 = vmax.f32 %v889, 0.0
  %v922 = vmax.f32 %v892, 0.0
  %v923 = vmax.f32 %v897, 0.0
  %v924 = vmax.f32 %v900, 0.0
  %v925 = vmax.f32 %v905, 0.0
  %v926 = vmax.f32 %v908, 0.0
  %v927 = vmax.f32 %v911, %v912
  %v928 = vmax.f32 %v913, %v914
  %v929 = vmax.f32 %v915, %v916
  %v930 = vmax.f32 %v917, %v918
  %v931 = vmax.f32 %v919, %v920
  %v932 = vmax.f32 %v921, %v922
  %v933 = vmax.f32 %v923, %v924
  %v934 = vmax.f32 %v925, %v926
  %943 = vrot.lane.b32.xlu0 %v927, 32
  %v944 = vpop.permute.xlu0 %943
  %945 = vrot.lane.b32.xlu0 %v928, 32
  %v946 = vpop.permute.xlu0 %945
  %947 = vrot.lane.b32.xlu0 %v929, 32
  %v948 = vpop.permute.xlu0 %947
  %949 = vrot.lane.b32.xlu0 %v930, 32
  %v950 = vpop.permute.xlu0 %949
  %951 = vrot.lane.b32.xlu0 %v931, 32
  %v952 = vpop.permute.xlu0 %951
  %953 = vrot.lane.b32.xlu0 %v932, 32
  %v954 = vpop.permute.xlu0 %953
  %955 = vrot.lane.b32.xlu0 %v933, 32
  %v956 = vpop.permute.xlu0 %955
  %957 = vrot.lane.b32.xlu0 %v934, 32
  %v958 = vpop.permute.xlu0 %957
  %967 = vrot.lane.b32.xlu0 %v927, 64
  %v968 = vpop.permute.xlu0 %967
  %969 = vrot.lane.b32.xlu0 %v928, 64
  %v970 = vpop.permute.xlu0 %969
  %971 = vrot.lane.b32.xlu0 %v929, 64
  %v972 = vpop.permute.xlu0 %971
  %973 = vrot.lane.b32.xlu0 %v930, 64
  %v974 = vpop.permute.xlu0 %973
  %975 = vrot.lane.b32.xlu0 %v931, 64
  %v976 = vpop.permute.xlu0 %975
  %977 = vrot.lane.b32.xlu0 %v932, 64
  %v978 = vpop.permute.xlu0 %977
  %979 = vrot.lane.b32.xlu0 %v933, 64
  %v980 = vpop.permute.xlu0 %979
  %981 = vrot.lane.b32.xlu0 %v934, 64
  %v982 = vpop.permute.xlu0 %981
  %991 = vrot.lane.b32.xlu0 %v928, 96
  %v992 = vpop.permute.xlu0 %991
  %993 = vrot.lane.b32.xlu0 %v929, 96
  %v994 = vpop.permute.xlu0 %993
  %995 = vrot.lane.b32.xlu0 %v930, 96
  %v996 = vpop.permute.xlu0 %995
  %997 = vrot.lane.b32.xlu0 %v931, 96
  %v998 = vpop.permute.xlu0 %997
  %999 = vrot.lane.b32.xlu0 %v932, 96
  %v1000 = vpop.permute.xlu0 %999
  %1001 = vrot.lane.b32.xlu0 %v933, 96
  %v1002 = vpop.permute.xlu0 %1001
  %1003 = vrot.lane.b32.xlu0 %v934, 96
  %v1004 = vpop.permute.xlu0 %1003
  %1005 = vrot.lane.b32.xlu0 0.0, 96
  %v1006 = vpop.permute.xlu0 %1005
  %v1015 = vsel %vm225, 0.0, %v191
  %v1016 = vsel %vm225, 0.0, %v944
  %v1017 = vsel %vm225, %v927, %v946
  %v1018 = vsel %vm225, %v928, %v948
  %v1019 = vsel %vm225, %v929, %v950
  %v1020 = vsel %vm225, %v930, %v952
  %v1021 = vsel %vm225, %v931, %v954
  %v1022 = vsel %vm225, %v932, %v956
  %v1023 = vsel %vm225, %v933, %v958
  %v1024 = vsel %vm315, %v1015, %v968
  %v1025 = vsel %vm315, %v1016, %v970
  %v1026 = vsel %vm315, %v1017, %v972
  %v1027 = vsel %vm315, %v1018, %v974
  %v1028 = vsel %vm315, %v1019, %v976
  %v1029 = vsel %vm315, %v1020, %v978
  %v1030 = vsel %vm315, %v1021, %v980
  %v1031 = vsel %vm315, %v1022, %v982
  %v1032 = vsel %vm315, %v1023, %v677
  %v1033 = vsel %vm789, %v1024, %v992
  %v1034 = vsel %vm789, %v1025, %v994
  %v1035 = vsel %vm789, %v1026, %v996
  %v1036 = vsel %vm789, %v1027, %v998
  %v1037 = vsel %vm789, %v1028, %v1000
  %v1038 = vsel %vm789, %v1029, %v1002
  %v1039 = vsel %vm789, %v1030, %v1004
  %v1040 = vsel %vm789, %v1031, %v1006
  %v1041 = vsel %vm789, %v1032, %v1006
  %v1042 = vpack.c.bf16 %v1034, %v1033
  %v1043 = vpack.c.bf16 %v1036, %v1035
  %v1044 = vpack.c.bf16 %v1038, %v1037
  %v1045 = vpack.c.bf16 %v1040, %v1039
  %v1046 = vpack.c.bf16 %v1041, %v1041
  %v1047 = vld [vmem:[%s5] sm:$0xf]
  %v1048 = vld [vmem:[%s5 + $0x4] sm:$0xf]
  %v1049 = vld [vmem:[%s5 + $0x8] sm:$0xf]
  %v1050 = vld [vmem:[%s5 + $0xc] sm:$0xf]
  %v1051 = vld [vmem:[%s5 + $0x10] sm:$0xf]
  %v1052 = vld [vmem:[%s5 + $0x14] sm:$0xf]
  %v1053 = vld [vmem:[%s5 + $0x18] sm:$0xf]
  %v1054 = vld [vmem:[%s5 + $0x1c] sm:$0xf]
  %v1055 = vld [vmem:[%s5 + $0x20] sm:$0xf]
  %v1056 = vld [vmem:[%s5 + $0x24] sm:$0xf]
  %v1057 = vld [vmem:[%s5 + $0x28] sm:$0xf]
  %v1058 = vld [vmem:[%s5 + $0x2c] sm:$0xf]
  %v1059 = vld [vmem:[%s5 + $0x30] sm:$0xf]
  %v1060 = vld [vmem:[%s5 + $0x34] sm:$0xf]
  %v1061 = vld [vmem:[%s5 + $0x38] sm:$0xf]
  %v1062 = vld [vmem:[%s5 + $0x3c] sm:$0xf]
  %v1063 = vld [vmem:[%s6] sm:$0x1]
  %v1065 = vlaneseq
  %v1066 = vshrl.u32 %v1065, 7
  %v1067 = vsub.s32 0, %v1066
  %v1068 = vrot.slane %v1063, %v1067
  %v1086 = vunpack.c.l.b16 %v1047
  %v1087 = vunpack.c.l.b16 %v1048
  %v1088 = vunpack.c.l.b16 %v1049
  %v1089 = vunpack.c.l.b16 %v1050
  %v1090 = vunpack.c.l.b16 %v1051
  %v1091 = vunpack.c.l.b16 %v1052
  %v1092 = vunpack.c.l.b16 %v1053
  %v1093 = vunpack.c.l.b16 %v1054
  %v1094 = vunpack.c.l.b16 %v1055
  %v1095 = vunpack.c.l.b16 %v1056
  %v1096 = vunpack.c.l.b16 %v1057
  %v1097 = vunpack.c.l.b16 %v1058
  %v1098 = vunpack.c.l.b16 %v1059
  %v1099 = vunpack.c.l.b16 %v1060
  %v1100 = vunpack.c.l.b16 %v1061
  %v1101 = vunpack.c.l.b16 %v1062
  %v1102 = vpack.c.b16 %v1087, %v1086
  %v1103 = vpack.c.b16 %v1089, %v1088
  %v1104 = vpack.c.b16 %v1091, %v1090
  %v1105 = vpack.c.b16 %v1093, %v1092
  %v1106 = vpack.c.b16 %v1095, %v1094
  %v1107 = vpack.c.b16 %v1097, %v1096
  %v1108 = vpack.c.b16 %v1099, %v1098
  %v1109 = vpack.c.b16 %v1101, %v1100
  %1118 = vmatprep.subr.bf16.mxu0 0
  %1119 = vmatpush1.bf16.msra.mxu0 %v1102
  %1120 = vmatprep.subr.bf16.mxu0 0
  %1121 = vmatpush1.bf16.msra.mxu0 %v1103
  %1122 = vmatprep.subr.bf16.mxu0 0
  %1123 = vmatpush1.bf16.msra.mxu0 %v1104
  %1124 = vmatprep.subr.bf16.mxu0 0
  %1125 = vmatpush1.bf16.msra.mxu0 %v1105
  %1126 = vmatprep.subr.bf16.mxu0 0
  %1127 = vmatpush1.bf16.msra.mxu0 %v1106
  %1128 = vmatprep.subr.bf16.mxu0 0
  %1129 = vmatpush1.bf16.msra.mxu0 %v1107
  %1130 = vmatprep.subr.bf16.mxu0 0
  %1131 = vmatpush1.bf16.msra.mxu0 %v1108
  %1132 = vmatprep.subr.bf16.mxu0 0
  %1133 = vmatpush1.bf16.msra.mxu0 %v1109
  %1134 = vmatprep.subr.bf16.mxu0 0
  %1135 = vmatpush1.bf16.msra.mxu0 0
  %1136 = vmatprep.subr.bf16.mxu0 0
  %1137 = vmatpush1.bf16.msra.mxu0 0
  %1138 = vmatprep.subr.bf16.mxu0 0
  %1139 = vmatpush1.bf16.msra.mxu0 0
  %1140 = vmatprep.subr.bf16.mxu0 0
  %1141 = vmatpush1.bf16.msra.mxu0 0
  %1142 = vmatprep.subr.bf16.mxu0 0
  %1143 = vmatpush1.bf16.msra.mxu0 0
  %1144 = vmatprep.subr.bf16.mxu0 0
  %1145 = vmatpush1.bf16.msra.mxu0 0
  %1146 = vmatprep.subr.bf16.mxu0 0
  %1147 = vmatpush1.bf16.msra.mxu0 0
  %1148 = vmatprep.subr.bf16.mxu0 0
  %1149 = vmatpush1.bf16.msra.mxu0 0
  %1150 = vmatprep.mubr.bf16.mxu0 0
  %1151 = vmatmul.mubr.bf16.gmra.mrb[0].mxu0 %v1042
  %v1152 = vpop.f32.mrb[0].mxu0
  %v1153 = vadd.f32 %v1068, %v1152
  %v1154 = vpop.f32.mrb[0].mxu0
  %v1155 = vpop.f32.mrb[0].mxu0
  %v1156 = vadd.f32 %v1068, %v1155
  %v1157 = vpop.f32.mrb[0].mxu0
  %1158 = vmatprep.mubr.bf16.mxu0 0
  %1159 = vmatmul.mubr.bf16.gmra.mrb[0].mxu0 %v1043
  %v1160 = vpop.f32.mrb[0].mxu0
  %v1161 = vadd.f32 %v1068, %v1160
  %v1162 = vpop.f32.mrb[0].mxu0
  %v1163 = vpop.f32.mrb[0].mxu0
  %v1164 = vadd.f32 %v1068, %v1163
  %v1165 = vpop.f32.mrb[0].mxu0
  %1166 = vmatprep.mubr.bf16.mxu0 0
  %1167 = vmatmul.mubr.bf16.gmra.mrb[0].mxu0 %v1044
  %v1168 = vpop.f32.mrb[0].mxu0
  %v1169 = vadd.f32 %v1068, %v1168
  %v1170 = vpop.f32.mrb[0].mxu0
  %v1171 = vpop.f32.mrb[0].mxu0
  %v1172 = vadd.f32 %v1068, %v1171
  %v1173 = vpop.f32.mrb[0].mxu0
  %1174 = vmatprep.mubr.bf16.mxu0 0
  %1175 = vmatmul.mubr.bf16.gmra.mrb[0].mxu0 %v1045
  %v1176 = vpop.f32.mrb[0].mxu0
  %v1177 = vadd.f32 %v1068, %v1176
  %v1178 = vpop.f32.mrb[0].mxu0
  %v1179 = vpop.f32.mrb[0].mxu0
  %v1180 = vadd.f32 %v1068, %v1179
  %v1181 = vpop.f32.mrb[0].mxu0
  %1182 = vmatprep.mubr.bf16.mxu0 0
  %1183 = vmatmul.mubr.bf16.gmra.mrb[0].mxu0 %v1046
  %v1184 = vpop.f32.mrb[0].mxu0
  %v1185 = vpop.f32.mrb[0].mxu0
  %v1186 = vpop.f32.mrb[0].mxu0
  %v1187 = vpop.f32.mrb[0].mxu0
  %1188 = vdwg.mxu0
  %v1189 = vmax.f32 %v1153, 0.0
  %v1190 = vmax.f32 %v1156, 0.0
  %v1191 = vmax.f32 %v1161, 0.0
  %v1192 = vmax.f32 %v1164, 0.0
  %v1193 = vmax.f32 %v1169, 0.0
  %v1194 = vmax.f32 %v1172, 0.0
  %v1195 = vmax.f32 %v1177, 0.0
  %v1196 = vmax.f32 %v1180, 0.0
  %v1197 = vmax.f32 %v1189, %v1190
  %v1198 = vmax.f32 %v1191, %v1192
  %v1199 = vmax.f32 %v1193, %v1194
  %v1200 = vmax.f32 %v1195, %v1196
  %1202 = vrot.lane.b32.xlu0 %v1198, 32
  %v1203 = vpop.permute.xlu0 %1202
  %1206 = vrot.lane.b32.xlu0 %v1199, 64
  %v1207 = vpop.permute.xlu0 %1206
  %1210 = vrot.lane.b32.xlu0 %v1200, 96
  %v1211 = vpop.permute.xlu0 %1210
  %v1213 = vsel %vm225, %v1197, %v1203
  %v1214 = vsel %vm315, %v1213, %v1207
  %v1215 = vsel %vm789, %v1214, %v1211
  %v1216 = vpack.c.bf16 %v1215, %v1215
  %1217 = vst [vmem:[%s7] sm:$0xf] %v1216
  %v1218 = vrot.slane %v1215, 4
  %v1219 = vadd.f32 %v1215, %v1218
  %v1220 = vrot.slane %v1219, 2
  %v1221 = vadd.f32 %v1219, %v1220
  %v1222 = vrot.slane %v1221, 1
  %v1223 = vadd.f32 %v1221, %v1222
  %v1224 = vmul.f32 %v1215, %v1215
  %v1225 = vrot.slane %v1224, 4
  %v1226 = vadd.f32 %v1224, %v1225
  %v1227 = vrot.slane %v1226, 2
  %v1228 = vadd.f32 %v1226, %v1227
  %v1229 = vrot.slane %v1228, 1
  %v1230 = vadd.f32 %v1228, %v1229
  %1231 = vst [vmem:[%s8] sm:$0x1] %v1223
  %1232 = vst [vmem:[%s8 + $0x1] sm:$0x1] %v1230
  // Predicated region
  $region30: #{char_cnn_forward.2} parent=0 // pred_check
    _
  $region31: #{char_cnn_forward.2} parent=0 // pred_check_branch
    %1234 = sbr.rel (0) target = $region33
  $region32: #{char_cnn_forward.2} parent=0 // pred_region
    _
  $region33: #{char_cnn_forward.2} parent=0 // pred_fallthru
    _
  // Predicated region
  $region34: #{char_cnn_forward.2} parent=0 // pred_check
    _
  $region35: #{char_cnn_forward.2} parent=0 // pred_check_branch
    %1236 = sbr.rel (0) target = $region37
  $region36: #{char_cnn_forward.2} parent=0 // pred_region
    _
  $region37: #{char_cnn_forward.2} parent=0 // pred_fallthru
    _
  // Predicated region
  $region38: #{char_cnn_forward.2} parent=0 // pred_check
    _
  $region39: #{char_cnn_forward.2} parent=0 // pred_check_branch
    %1238 = sbr.rel (0) target = $region41
  $region40: #{char_cnn_forward.2} parent=0 // pred_region
    _
  $region41: #{char_cnn_forward.2} parent=0 // pred_fallthru
    _
  // Predicated region
  $region42: #{char_cnn_forward.2} parent=0 // pred_check
    _
  $region43: #{char_cnn_forward.2} parent=0 // pred_check_branch
    %1240 = sbr.rel (0) target = $region45
  $region44: #{char_cnn_forward.2} parent=0 // pred_region
    _
  $region45: #{char_cnn_forward.2} parent=0 // pred_fallthru
    _

</llo_original>
